<compile_context>
chip_gen: v5e
topology: v5e:2x2
jax: 0.10.0
libtpu: 0.0.40
codegen_flags: <defaults>
</compile_context>

<pallas_src>
import functools

import jax
import jax.numpy as jnp
from jax.experimental import pallas as pl
from jax.experimental.pallas import tpu as pltpu


# ---------------------------------------------------------------------------
# Per-generation tile policy (derived from VMEM capacity; conservative default)
# ---------------------------------------------------------------------------

def _vmem_capacity_bytes():
    try:
        return int(pltpu.get_tpu_info().vmem_capacity_bytes)
    except Exception:
        return None


_VMEM_CAP = _vmem_capacity_bytes()
_CAP_FOR_POLICY = _VMEM_CAP if _VMEM_CAP is not None else 64 * 1024 * 1024

if _CAP_FOR_POLICY <= 80 * 1024 * 1024:
    # v7x-class TensorCore (64 MiB VMEM): smaller activation tiles.
    _ROW_TILE_MAX = 512     # GEMM row tile
    _Q_TILE_MAX = 256       # attention query-row tile
    _KV_TILE_MAX = 256      # attention key/value tile
else:
    # v5e / v6e (128 MiB VMEM): larger tiles amortize per-grid-step overhead
    # and track the HBM roofline better.
    _ROW_TILE_MAX = 1024
    _Q_TILE_MAX = 512
    _KV_TILE_MAX = 512

_VMEM_LIMIT = (None if _VMEM_CAP is None
               else min(int(_VMEM_CAP * 3 // 4), 96 * 1024 * 1024))


def _compiler_params(dimension_semantics):
    kwargs = dict(dimension_semantics=dimension_semantics)
    if _VMEM_LIMIT is not None:
        kwargs["vmem_limit_bytes"] = _VMEM_LIMIT
    return pltpu.CompilerParams(**kwargs)


def _pick_tile(extent, tmax):
    """Full extent if it fits, otherwise the per-generation tile cap."""
    return extent if extent <= tmax else tmax


# ---------------------------------------------------------------------------
# QKV projection:  (rows, D) @ (3, D, D) -> (3, rows, D), Q columns pre-scaled
# ---------------------------------------------------------------------------

def _qkv_kernel(x_ref, w_ref, o_ref, *, q_scale):
    acc = jnp.dot(x_ref[...], w_ref[...], preferred_element_type=jnp.float32)
    # Fold the 1/sqrt(head_dim) attention scale into the Q slab (j == 0) so the
    # attention kernel never scales (tq, N) logits on the VPU.
    scale = jnp.where(pl.program_id(1) == 0, q_scale, 1.0).astype(jnp.float32)
    o_ref[...] = (acc * scale).astype(o_ref.dtype)


def _qkv_projection(x2, w3, *, q_scale, out_dtype):
    rows, d = x2.shape
    tm = _pick_tile(rows, _ROW_TILE_MAX)
    grid = (pl.cdiv(rows, tm), 3)

    return pl.pallas_call(
        functools.partial(_qkv_kernel, q_scale=q_scale),
        out_shape=jax.ShapeDtypeStruct((3, rows, d), out_dtype),
        grid_spec=pltpu.PrefetchScalarGridSpec(
            num_scalar_prefetch=0,
            grid=grid,
            in_specs=[
                # Activation row tile: constant across j -> fetched once per i.
                pl.BlockSpec((tm, d), lambda i, j: (i, 0)),
                # One (D, D) q/k/v weight slab per inner step (column tiling).
                pl.BlockSpec((None, d, d), lambda i, j: (j, 0, 0)),
            ],
            out_specs=pl.BlockSpec((None, tm, d), lambda i, j: (j, i, 0)),
        ),
        compiler_params=_compiler_params(("parallel", "parallel")),
    )(x2, w3)


# ---------------------------------------------------------------------------
# Fused attention core + output projection (flash-style online softmax)
# ---------------------------------------------------------------------------

def _attn_proj_kernel(q_ref, k_ref, v_ref, wp_ref, bp_ref, o_ref,
                      m_sc, l_sc, acc_sc, *,
                      num_heads, head_dim, seq_len, kv_tile):
    # q_ref:  (tq, D)   pre-scaled query rows (bf16)
    # k_ref:  (tk, D)   key tile,  v_ref: (tk, D) value tile
    # wp_ref: (D, D)    output-projection weight (VMEM resident)
    # bp_ref: (1, D)    output-projection bias (f32)
    # o_ref:  (tq, D)   final (projected) output tile
    kv = pl.program_id(2)
    n_kv = pl.num_programs(2)
    tq = q_ref.shape[0]

    @pl.when(kv == 0)
    def _():
        m_sc[...] = jnp.full(m_sc.shape, -jnp.inf, dtype=m_sc.dtype)
        l_sc[...] = jnp.zeros(l_sc.shape, dtype=l_sc.dtype)
        acc_sc[...] = jnp.zeros(acc_sc.shape, dtype=acc_sc.dtype)

    needs_mask = (seq_len % kv_tile) != 0   # static Python bool
    if needs_mask:
        col = jax.lax.broadcasted_iota(jnp.int32, (tq, kv_tile), 1)
        col_valid = (col + kv * kv_tile) < seq_len            # (tq, tk)
        row = jax.lax.broadcasted_iota(jnp.int32, (kv_tile, 1), 0)
        row_valid = (row + kv * kv_tile) < seq_len            # (tk, 1)

    for hh in range(num_heads):
        sl = slice(hh * head_dim, (hh + 1) * head_dim)
        q = q_ref[:, sl]                                      # (tq, Dh)
        k = k_ref[:, sl]                                      # (tk, Dh)
        v = v_ref[:, sl]                                      # (tk, Dh)
        if needs_mask:
            v = jnp.where(row_valid, v, jnp.zeros_like(v))

        # Logits in f32 on the MXU (q already carries the softmax scale).
        s = jax.lax.dot_general(q, k, (((1,), (1,)), ((), ())),
                                preferred_element_type=jnp.float32)
        if needs_mask:
            s = jnp.where(col_valid, s, jnp.float32(-1e30))

        m_prev = m_sc[hh]                                     # (tq, 1)
        m_new = jnp.maximum(m_prev, jnp.max(s, axis=-1, keepdims=True))
        alpha = jnp.exp(m_prev - m_new)
        p = jnp.exp(s - m_new)                                # unnormalized
        l_sc[hh] = alpha * l_sc[hh] + jnp.sum(p, axis=-1, keepdims=True)
        acc_sc[hh] = alpha * acc_sc[hh] + jnp.dot(
            p.astype(v.dtype), v, preferred_element_type=jnp.float32)
        m_sc[hh] = m_new

    @pl.when(kv == n_kv - 1)
    def _():
        # Deferred normalization on the (tq, Dh) accumulators (EUP reciprocal),
        # then fused output projection + bias; single lane-dense store.
        outs = []
        for hh in range(num_heads):
            inv = pl.reciprocal(l_sc[hh], approx=True)        # (tq, 1)
            outs.append(acc_sc[hh] * inv)
        merged = jnp.concatenate(outs, axis=-1).astype(wp_ref.dtype)  # (tq, D)
        res = jnp.dot(merged, wp_ref[...], preferred_element_type=jnp.float32)
        res = res + bp_ref[...].astype(jnp.float32)
        o_ref[...] = res.astype(o_ref.dtype)


def _attention_proj(qkv, w_proj, b_proj, *, num_heads, out_dtype):
    """qkv: (3, B, N, D) -> projected attention output (B, N, D)."""
    _, B, N, D = qkv.shape
    Dh = D // num_heads
    tq = _pick_tile(N, _Q_TILE_MAX)
    tk = _pick_tile(N, _KV_TILE_MAX)
    grid = (B, pl.cdiv(N, tq), pl.cdiv(N, tk))

    kernel = functools.partial(
        _attn_proj_kernel, num_heads=num_heads, head_dim=Dh,
        seq_len=N, kv_tile=tk)

    # NOTE: the constant-index specs (W_proj, bias) could request
    # pipeline_mode=pl.Buffered(1) to drop the second buffer; omitted to keep
    # the call maximally portable.
    return pl.pallas_call(
        kernel,
        out_shape=jax.ShapeDtypeStruct((B, N, D), out_dtype),
        grid_spec=pltpu.PrefetchScalarGridSpec(
            num_scalar_prefetch=0,
            grid=grid,
            in_specs=[
                # Q rows only (no K/V columns): constant across the kv axis.
                pl.BlockSpec((None, None, tq, D), lambda b, i, k: (0, b, i, 0)),
                # K tile / V tile: only the slab actually used.
                pl.BlockSpec((None, None, tk, D), lambda b, i, k: (1, b, k, 0)),
                pl.BlockSpec((None, None, tk, D), lambda b, i, k: (2, b, k, 0)),
                # Output-projection weight + bias: constant index, VMEM resident.
                pl.BlockSpec((D, D), lambda b, i, k: (0, 0)),
                pl.BlockSpec((1, D), lambda b, i, k: (0, 0)),
            ],
            out_specs=pl.BlockSpec((None, tq, D), lambda b, i, k: (b, i, 0)),
            scratch_shapes=[
                pltpu.VMEM((num_heads, tq, 1), jnp.float32),    # running max
                pltpu.VMEM((num_heads, tq, 1), jnp.float32),    # running sum
                pltpu.VMEM((num_heads, tq, Dh), jnp.float32),   # running PV acc
            ],
        ),
        compiler_params=_compiler_params(("parallel", "parallel", "arbitrary")),
    )(qkv, qkv, qkv, w_proj, b_proj)


# ------------------------------- forward -------------------------------------

@functools.partial(jax.jit, static_argnames=("num_heads", "compute_dtype"))
def attention_forward(x, w_qkv, w_proj, b_proj, *, num_heads,
                      compute_dtype=jnp.bfloat16):
    """x: (B, N, D) -> (B, N, D).  w_qkv: (D, 3D), w_proj: (D, D), b_proj: (1, D)."""
    B, N, D = x.shape
    Dh = D // num_heads
    scale = float(Dh) ** -0.5
    cd = compute_dtype

    x2 = x.reshape(B * N, D).astype(cd)
    # (D, 3D) qkv-major columns -> (3, D, D): one weight slab per q/k/v.
    w3 = jnp.transpose(w_qkv.reshape(D, 3, D), (1, 0, 2)).astype(cd)

    qkv = _qkv_projection(x2, w3, q_scale=scale, out_dtype=cd)   # (3, B*N, D)
    qkv = qkv.reshape(3, B, N, D)

    out = _attention_proj(qkv, w_proj.astype(cd),
                          b_proj.astype(jnp.float32).reshape(1, D),
                          num_heads=num_heads, out_dtype=x.dtype)
    # TODO(synk): proj_drop (nn.Dropout) is identity at inference; attention-map /
    # register_hook bookkeeping has no forward-compute effect and is omitted.
    return out


# ------------------------------ reference -------------------------------------

def _reference(x, w_qkv, w_proj, b_proj, num_heads, compute_dtype=jnp.bfloat16):
    """Pure-JAX reference with the kernel's precision policy (bf16 matmul
    operands, f32 accumulation/softmax, scale folded into q)."""
    B, N, D = x.shape
    H = num_heads
    Dh = D // H
    scale = float(Dh) ** -0.5
    cd = compute_dtype

    x2 = x.reshape(B * N, D).astype(cd)
    qkv = jnp.dot(x2, w_qkv.astype(cd), preferred_element_type=jnp.float32)
    qkv = qkv.reshape(B, N, 3, H, Dh)                       # 'b n (qkv h d)'
    q = (qkv[:, :, 0] * scale).astype(cd).transpose(0, 2, 1, 3)   # (B, H, N, Dh)
    k = qkv[:, :, 1].astype(cd).transpose(0, 2, 1, 3)
    v = qkv[:, :, 2].astype(cd).transpose(0, 2, 1, 3)

    s = jnp.einsum('bhid,bhjd->bhij', q, k, preferred_element_type=jnp.float32)
    m = jnp.max(s, axis=-1, keepdims=True)
    p = jnp.exp(s - m)
    attn = p / jnp.sum(p, axis=-1, keepdims=True)

    o = jnp.einsum('bhij,bhjd->bhid', attn.astype(cd), v,
                   preferred_element_type=jnp.float32).astype(cd)
    o = o.transpose(0, 2, 1, 3).reshape(B * N, D)           # 'b h n d -> b n (h d)'
    out = jnp.dot(o, w_proj.astype(cd), preferred_element_type=jnp.float32) + b_proj
    return out.reshape(B, N, D).astype(x.dtype)


if __name__ == "__main__":
    B, N, D, H = 2, 8, 32, 4   # batch=2, seq=8, dim=32, num_heads=4 (head_dim=8)

    key = jax.random.PRNGKey(0)
    kx, kq, kp, kb = jax.random.split(key, 4)

    x = jax.random.normal(kx, (B, N, D), dtype=jnp.float32)
    w_qkv = jax.random.normal(kq, (D, 3 * D), dtype=jnp.float32) * 0.1
    w_proj = jax.random.normal(kp, (D, D), dtype=jnp.float32) * 0.1
    b_proj = jax.random.normal(kb, (1, D), dtype=jnp.float32) * 0.05

    out = attention_forward(x, w_qkv, w_proj, b_proj, num_heads=H)
    jax.block_until_ready(out)

    ref = _reference(x, w_qkv, w_proj, b_proj, H)
    assert out.shape == (B, N, D)
    err = float(jnp.max(jnp.abs(out - ref)))
    assert jnp.allclose(out, ref, atol=3e-3, rtol=3e-3), \
        f"mismatch vs reference, max err {err}"

    print("KERNEL_OK")
</pallas_src>

<mosaic_0001>
module attributes {stable_mosaic.version = 11 : i64} {
  func.func @_qkv_kernel(%arg0: i32, %arg1: i32, %arg2: memref<16x32xbf16, #tpu.memory_space<vmem>>, %arg3: memref<1x32x32xbf16, #tpu.memory_space<vmem>>, %arg4: memref<1x16x32xbf16, #tpu.memory_space<vmem>>) attributes {dimension_semantics = [#tpu.dimension_semantics<parallel>, #tpu.dimension_semantics<parallel>], iteration_bounds = array<i64: 1, 3>, scalar_prefetch = 0 : i64, scratch_operands = 0 : i64, tpu.core_type = #tpu.core_type<tc>, window_params = [{transform_indices = @transform_0, window_bounds = array<i64: 16, 32>}, {transform_indices = @transform_1, window_bounds = array<i64: 1, 32, 32>}, {transform_indices = @transform_2, window_bounds = array<i64: 1, 16, 32>}]} {
    %c0 = arith.constant 0 : index
    %c0_0 = arith.constant 0 : index
    %0 = vector.load %arg2[%c0, %c0_0] : memref<16x32xbf16, #tpu.memory_space<vmem>>, vector<16x32xbf16>
    %c0_1 = arith.constant 0 : index
    %c0_2 = arith.constant 0 : index
    %c0_3 = arith.constant 0 : index
    %1 = vector.load %arg3[%c0_1, %c0_2, %c0_3] : memref<1x32x32xbf16, #tpu.memory_space<vmem>>, vector<1x32x32xbf16>
    %2 = vector.shape_cast %1 : vector<1x32x32xbf16> to vector<32x32xbf16>
    %cst = arith.constant dense<0.000000e+00> : vector<16x32xf32>
    %3 = tpu.matmul %0, %2, %cst {dimension_numbers = #tpu.dot_dimension_numbers<[1], [0], [0], [1], [0, 0, 1, 1], [], []>} : vector<16x32xbf16>, vector<32x32xbf16>, vector<16x32xf32> -> vector<16x32xf32>
    %c0_i32 = arith.constant 0 : i32
    %4 = arith.cmpi eq, %arg1, %c0_i32 : i32
    %cst_4 = arith.constant 0.353553385 : f32
    %cst_5 = arith.constant 1.000000e+00 : f32
    %5 = arith.select %4, %cst_4, %cst_5 : f32
    %6 = vector.broadcast %5 : f32 to vector<16x32xf32>
    %7 = arith.mulf %3, %6 : vector<16x32xf32>
    %8 = arith.truncf %7 : vector<16x32xf32> to vector<16x32xbf16>
    %c0_6 = arith.constant 0 : index
    %c0_7 = arith.constant 0 : index
    %c0_8 = arith.constant 0 : index
    %9 = vector.load %arg4[%c0_6, %c0_7, %c0_8] : memref<1x16x32xbf16, #tpu.memory_space<vmem>>, vector<1x16x32xbf16>
    %10 = vector.shape_cast %9 : vector<1x16x32xbf16> to vector<16x32xbf16>
    %11 = vector.shape_cast %8 : vector<16x32xbf16> to vector<1x16x32xbf16>
    tpu.vector_store %arg4[%c0_6, %c0_7, %c0_8], %11 {strides = array<i32>} : memref<1x16x32xbf16, #tpu.memory_space<vmem>>, vector<1x16x32xbf16>,
    return
  }
  func.func @transform_0(%arg0: i32, %arg1: i32) -> (i32, i32) {
    %c0_i32 = arith.constant 0 : i32
    %c0_i32_0 = arith.constant 0 : i32
    return %arg0, %c0_i32 : i32, i32
  }
  func.func @transform_1(%arg0: i32, %arg1: i32) -> (i32, i32, i32) {
    %c0_i32 = arith.constant 0 : i32
    %c0_i32_0 = arith.constant 0 : i32
    %c0_i32_1 = arith.constant 0 : i32
    return %arg1, %c0_i32, %c0_i32_0 : i32, i32, i32
  }
  func.func @transform_2(%arg0: i32, %arg1: i32) -> (i32, i32, i32) {
    %c0_i32 = arith.constant 0 : i32
    %c0_i32_0 = arith.constant 0 : i32
    return %arg1, %arg0, %c0_i32 : i32, i32, i32
  }
}

module attributes {stable_mosaic.version = 11 : i64} {
  func.func @_attn_proj_kernel(%arg0: i32, %arg1: i32, %arg2: i32, %arg3: memref<1x1x8x32xbf16, #tpu.memory_space<vmem>>, %arg4: memref<1x1x8x32xbf16, #tpu.memory_space<vmem>>, %arg5: memref<1x1x8x32xbf16, #tpu.memory_space<vmem>>, %arg6: memref<32x32xbf16, #tpu.memory_space<vmem>>, %arg7: memref<1x32xf32, #tpu.memory_space<vmem>>, %arg8: memref<1x8x32xf32, #tpu.memory_space<vmem>>, %arg9: memref<4x8x1xf32, #tpu.memory_space<vmem>>, %arg10: memref<4x8x1xf32, #tpu.memory_space<vmem>>, %arg11: memref<4x8x8xf32, #tpu.memory_space<vmem>>) attributes {dimension_semantics = [#tpu.dimension_semantics<parallel>, #tpu.dimension_semantics<parallel>, #tpu.dimension_semantics<arbitrary>], iteration_bounds = array<i64: 2, 1, 1>, scalar_prefetch = 0 : i64, scratch_operands = 3 : i64, tpu.core_type = #tpu.core_type<tc>, window_params = [{transform_indices = @transform_0, window_bounds = array<i64: 1, 1, 8, 32>}, {transform_indices = @transform_1, window_bounds = array<i64: 1, 1, 8, 32>}, {transform_indices = @transform_2, window_bounds = array<i64: 1, 1, 8, 32>}, {pipeline_mode = #tpu.pipeline_mode<synchronous>, transform_indices = @transform_3, window_bounds = array<i64: 32, 32>}, {pipeline_mode = #tpu.pipeline_mode<synchronous>, transform_indices = @transform_4, window_bounds = array<i64: 1, 32>}, {transform_indices = @transform_5, window_bounds = array<i64: 1, 8, 32>}]} {
    %c0_i32 = arith.constant 0 : i32
    %0 = arith.cmpi eq, %arg2, %c0_i32 : i32
    %1 = arith.extui %0 : i1 to i32
    %c0_i32_0 = arith.constant 0 : i32
    %2 = arith.cmpi ne, %1, %c0_i32_0 : i32
    scf.if %2 {
      %cst_131 = arith.constant 0xFF800000 : f32
      %162 = vector.broadcast %cst_131 : f32 to vector<4x8x1xf32>
      %c0_132 = arith.constant 0 : index
      %c0_133 = arith.constant 0 : index
      %c0_134 = arith.constant 0 : index
      %163 = vector.load %arg9[%c0_132, %c0_133, %c0_134] : memref<4x8x1xf32, #tpu.memory_space<vmem>>, vector<4x8x1xf32>
      tpu.vector_store %arg9[%c0_132, %c0_133, %c0_134], %162 {strides = array<i32>} : memref<4x8x1xf32, #tpu.memory_space<vmem>>, vector<4x8x1xf32>,
      %cst_135 = arith.constant 0.000000e+00 : f32
      %164 = vector.broadcast %cst_135 : f32 to vector<4x8x1xf32>
      %c0_136 = arith.constant 0 : index
      %c0_137 = arith.constant 0 : index
      %c0_138 = arith.constant 0 : index
      %165 = vector.load %arg10[%c0_136, %c0_137, %c0_138] : memref<4x8x1xf32, #tpu.memory_space<vmem>>, vector<4x8x1xf32>
      tpu.vector_store %arg10[%c0_136, %c0_137, %c0_138], %164 {strides = array<i32>} : memref<4x8x1xf32, #tpu.memory_space<vmem>>, vector<4x8x1xf32>,
      %cst_139 = arith.constant 0.000000e+00 : f32
      %166 = vector.broadcast %cst_139 : f32 to vector<4x8x8xf32>
      %c0_140 = arith.constant 0 : index
      %c0_141 = arith.constant 0 : index
      %c0_142 = arith.constant 0 : index
      %167 = vector.load %arg11[%c0_140, %c0_141, %c0_142] : memref<4x8x8xf32, #tpu.memory_space<vmem>>, vector<4x8x8xf32>
      tpu.vector_store %arg11[%c0_140, %c0_141, %c0_142], %166 {strides = array<i32>} : memref<4x8x8xf32, #tpu.memory_space<vmem>>, vector<4x8x8xf32>,
    } else {
    }
    %c0 = arith.constant 0 : index
    %c0_1 = arith.constant 0 : index
    %c0_2 = arith.constant 0 : index
    %c0_3 = arith.constant 0 : index
    %3 = vector.load %arg3[%c0, %c0_1, %c0_2, %c0_3] : memref<1x1x8x32xbf16, #tpu.memory_space<vmem>>, vector<1x1x8x8xbf16>
    %4 = vector.shape_cast %3 : vector<1x1x8x8xbf16> to vector<8x8xbf16>
    %c0_4 = arith.constant 0 : index
    %c0_5 = arith.constant 0 : index
    %c0_6 = arith.constant 0 : index
    %c0_7 = arith.constant 0 : index
    %5 = vector.load %arg4[%c0_4, %c0_5, %c0_6, %c0_7] : memref<1x1x8x32xbf16, #tpu.memory_space<vmem>>, vector<1x1x8x8xbf16>
    %6 = vector.shape_cast %5 : vector<1x1x8x8xbf16> to vector<8x8xbf16>
    %c0_8 = arith.constant 0 : index
    %c0_9 = arith.constant 0 : index
    %c0_10 = arith.constant 0 : index
    %c0_11 = arith.constant 0 : index
    %7 = vector.load %arg5[%c0_8, %c0_9, %c0_10, %c0_11] : memref<1x1x8x32xbf16, #tpu.memory_space<vmem>>, vector<1x1x8x8xbf16>
    %8 = vector.shape_cast %7 : vector<1x1x8x8xbf16> to vector<8x8xbf16>
    %cst = arith.constant dense<0.000000e+00> : vector<8x8xf32>
    %9 = tpu.matmul %4, %6, %cst {dimension_numbers = #tpu.dot_dimension_numbers<[1], [1], [0], [0], [0, 0, 1, 0], [], []>} : vector<8x8xbf16>, vector<8x8xbf16>, vector<8x8xf32> -> vector<8x8xf32>
    %c0_12 = arith.constant 0 : index
    %c0_13 = arith.constant 0 : index
    %c0_14 = arith.constant 0 : index
    %10 = vector.load %arg9[%c0_12, %c0_13, %c0_14] : memref<4x8x1xf32, #tpu.memory_space<vmem>>, vector<1x8x1xf32>
    %11 = vector.shape_cast %10 : vector<1x8x1xf32> to vector<8x1xf32>
    %cst_15 = arith.constant dense<0xFF800000> : vector<8xf32>
    %12 = vector.multi_reduction <maximumf>, %9, %cst_15 [1] : vector<8x8xf32> to vector<8xf32>
    %13 = vector.shape_cast %12 : vector<8xf32> to vector<8x1xf32>
    %14 = arith.maximumf %11, %13 : vector<8x1xf32>
    %15 = arith.subf %11, %14 : vector<8x1xf32>
    %16 = math.exp %15 : vector<8x1xf32>
    %17 = vector.broadcast %14 : vector<8x1xf32> to vector<8x8xf32>
    %18 = arith.subf %9, %17 : vector<8x8xf32>
    %19 = math.exp %18 : vector<8x8xf32>
    %c0_16 = arith.constant 0 : index
    %c0_17 = arith.constant 0 : index
    %c0_18 = arith.constant 0 : index
    %20 = vector.load %arg10[%c0_16, %c0_17, %c0_18] : memref<4x8x1xf32, #tpu.memory_space<vmem>>, vector<1x8x1xf32>
    %21 = vector.shape_cast %20 : vector<1x8x1xf32> to vector<8x1xf32>
    %22 = arith.mulf %16, %21 : vector<8x1xf32>
    %cst_19 = arith.constant dense<0.000000e+00> : vector<8xf32>
    %23 = vector.multi_reduction <add>, %19, %cst_19 [1] : vector<8x8xf32> to vector<8xf32>
    %24 = vector.shape_cast %23 : vector<8xf32> to vector<8x1xf32>
    %25 = arith.addf %22, %24 : vector<8x1xf32>
    %c0_20 = arith.constant 0 : index
    %c0_21 = arith.constant 0 : index
    %c0_22 = arith.constant 0 : index
    %26 = vector.load %arg10[%c0_20, %c0_21, %c0_22] : memref<4x8x1xf32, #tpu.memory_space<vmem>>, vector<1x8x1xf32>
    %27 = vector.shape_cast %26 : vector<1x8x1xf32> to vector<8x1xf32>
    %28 = vector.shape_cast %25 : vector<8x1xf32> to vector<1x8x1xf32>
    tpu.vector_store %arg10[%c0_20, %c0_21, %c0_22], %28 {strides = array<i32>} : memref<4x8x1xf32, #tpu.memory_space<vmem>>, vector<1x8x1xf32>,
    %c0_23 = arith.constant 0 : index
    %c0_24 = arith.constant 0 : index
    %c0_25 = arith.constant 0 : index
    %29 = vector.load %arg11[%c0_23, %c0_24, %c0_25] : memref<4x8x8xf32, #tpu.memory_space<vmem>>, vector<1x8x8xf32>
    %30 = vector.shape_cast %29 : vector<1x8x8xf32> to vector<8x8xf32>
    %31 = vector.broadcast %16 : vector<8x1xf32> to vector<8x8xf32>
    %32 = arith.mulf %31, %30 : vector<8x8xf32>
    %33 = arith.truncf %19 : vector<8x8xf32> to vector<8x8xbf16>
    %cst_26 = arith.constant dense<0.000000e+00> : vector<8x8xf32>
    %34 = tpu.matmul %33, %8, %cst_26 {dimension_numbers = #tpu.dot_dimension_numbers<[1], [0], [0], [1], [0, 0, 1, 1], [], []>} : vector<8x8xbf16>, vector<8x8xbf16>, vector<8x8xf32> -> vector<8x8xf32>
    %35 = arith.addf %32, %34 : vector<8x8xf32>
    %c0_27 = arith.constant 0 : index
    %c0_28 = arith.constant 0 : index
    %c0_29 = arith.constant 0 : index
    %36 = vector.load %arg11[%c0_27, %c0_28, %c0_29] : memref<4x8x8xf32, #tpu.memory_space<vmem>>, vector<1x8x8xf32>
    %37 = vector.shape_cast %36 : vector<1x8x8xf32> to vector<8x8xf32>
    %38 = vector.shape_cast %35 : vector<8x8xf32> to vector<1x8x8xf32>
    tpu.vector_store %arg11[%c0_27, %c0_28, %c0_29], %38 {strides = array<i32>} : memref<4x8x8xf32, #tpu.memory_space<vmem>>, vector<1x8x8xf32>,
    %c0_30 = arith.constant 0 : index
    %c0_31 = arith.constant 0 : index
    %c0_32 = arith.constant 0 : index
    %39 = vector.load %arg9[%c0_30, %c0_31, %c0_32] : memref<4x8x1xf32, #tpu.memory_space<vmem>>, vector<1x8x1xf32>
    %40 = vector.shape_cast %39 : vector<1x8x1xf32> to vector<8x1xf32>
    %41 = vector.shape_cast %14 : vector<8x1xf32> to vector<1x8x1xf32>
    tpu.vector_store %arg9[%c0_30, %c0_31, %c0_32], %41 {strides = array<i32>} : memref<4x8x1xf32, #tpu.memory_space<vmem>>, vector<1x8x1xf32>,
    %c0_33 = arith.constant 0 : index
    %c0_34 = arith.constant 0 : index
    %c0_35 = arith.constant 0 : index
    %c8 = arith.constant 8 : index
    %42 = vector.load %arg3[%c0_33, %c0_34, %c0_35, %c8] : memref<1x1x8x32xbf16, #tpu.memory_space<vmem>>, vector<1x1x8x8xbf16>
    %43 = vector.shape_cast %42 : vector<1x1x8x8xbf16> to vector<8x8xbf16>
    %c0_36 = arith.constant 0 : index
    %c0_37 = arith.constant 0 : index
    %c0_38 = arith.constant 0 : index
    %c8_39 = arith.constant 8 : index
    %44 = vector.load %arg4[%c0_36, %c0_37, %c0_38, %c8_39] : memref<1x1x8x32xbf16, #tpu.memory_space<vmem>>, vector<1x1x8x8xbf16>
    %45 = vector.shape_cast %44 : vector<1x1x8x8xbf16> to vector<8x8xbf16>
    %c0_40 = arith.constant 0 : index
    %c0_41 = arith.constant 0 : index
    %c0_42 = arith.constant 0 : index
    %c8_43 = arith.constant 8 : index
    %46 = vector.load %arg5[%c0_40, %c0_41, %c0_42, %c8_43] : memref<1x1x8x32xbf16, #tpu.memory_space<vmem>>, vector<1x1x8x8xbf16>
    %47 = vector.shape_cast %46 : vector<1x1x8x8xbf16> to vector<8x8xbf16>
    %cst_44 = arith.constant dense<0.000000e+00> : vector<8x8xf32>
    %48 = tpu.matmul %43, %45, %cst_44 {dimension_numbers = #tpu.dot_dimension_numbers<[1], [1], [0], [0], [0, 0, 1, 0], [], []>} : vector<8x8xbf16>, vector<8x8xbf16>, vector<8x8xf32> -> vector<8x8xf32>
    %c1 = arith.constant 1 : index
    %c0_45 = arith.constant 0 : index
    %c0_46 = arith.constant 0 : index
    %49 = vector.load %arg9[%c1, %c0_45, %c0_46] : memref<4x8x1xf32, #tpu.memory_space<vmem>>, vector<1x8x1xf32>
    %50 = vector.shape_cast %49 : vector<1x8x1xf32> to vector<8x1xf32>
    %cst_47 = arith.constant dense<0xFF800000> : vector<8xf32>
    %51 = vector.multi_reduction <maximumf>, %48, %cst_47 [1] : vector<8x8xf32> to vector<8xf32>
    %52 = vector.shape_cast %51 : vector<8xf32> to vector<8x1xf32>
    %53 = arith.maximumf %50, %52 : vector<8x1xf32>
    %54 = arith.subf %50, %53 : vector<8x1xf32>
    %55 = math.exp %54 : vector<8x1xf32>
    %56 = vector.broadcast %53 : vector<8x1xf32> to vector<8x8xf32>
    %57 = arith.subf %48, %56 : vector<8x8xf32>
    %58 = math.exp %57 : vector<8x8xf32>
    %c1_48 = arith.constant 1 : index
    %c0_49 = arith.constant 0 : index
    %c0_50 = arith.constant 0 : index
    %59 = vector.load %arg10[%c1_48, %c0_49, %c0_50] : memref<4x8x1xf32, #tpu.memory_space<vmem>>, vector<1x8x1xf32>
    %60 = vector.shape_cast %59 : vector<1x8x1xf32> to vector<8x1xf32>
    %61 = arith.mulf %55, %60 : vector<8x1xf32>
    %cst_51 = arith.constant dense<0.000000e+00> : vector<8xf32>
    %62 = vector.multi_reduction <add>, %58, %cst_51 [1] : vector<8x8xf32> to vector<8xf32>
    %63 = vector.shape_cast %62 : vector<8xf32> to vector<8x1xf32>
    %64 = arith.addf %61, %63 : vector<8x1xf32>
    %c1_52 = arith.constant 1 : index
    %c0_53 = arith.constant 0 : index
    %c0_54 = arith.constant 0 : index
    %65 = vector.load %arg10[%c1_52, %c0_53, %c0_54] : memref<4x8x1xf32, #tpu.memory_space<vmem>>, vector<1x8x1xf32>
    %66 = vector.shape_cast %65 : vector<1x8x1xf32> to vector<8x1xf32>
    %67 = vector.shape_cast %64 : vector<8x1xf32> to vector<1x8x1xf32>
    tpu.vector_store %arg10[%c1_52, %c0_53, %c0_54], %67 {strides = array<i32>} : memref<4x8x1xf32, #tpu.memory_space<vmem>>, vector<1x8x1xf32>,
    %c1_55 = arith.constant 1 : index
    %c0_56 = arith.constant 0 : index
    %c0_57 = arith.constant 0 : index
    %68 = vector.load %arg11[%c1_55, %c0_56, %c0_57] : memref<4x8x8xf32, #tpu.memory_space<vmem>>, vector<1x8x8xf32>
    %69 = vector.shape_cast %68 : vector<1x8x8xf32> to vector<8x8xf32>
    %70 = vector.broadcast %55 : vector<8x1xf32> to vector<8x8xf32>
    %71 = arith.mulf %70, %69 : vector<8x8xf32>
    %72 = arith.truncf %58 : vector<8x8xf32> to vector<8x8xbf16>
    %cst_58 = arith.constant dense<0.000000e+00> : vector<8x8xf32>
    %73 = tpu.matmul %72, %47, %cst_58 {dimension_numbers = #tpu.dot_dimension_numbers<[1], [0], [0], [1], [0, 0, 1, 1], [], []>} : vector<8x8xbf16>, vector<8x8xbf16>, vector<8x8xf32> -> vector<8x8xf32>
    %74 = arith.addf %71, %73 : vector<8x8xf32>
    %c1_59 = arith.constant 1 : index
    %c0_60 = arith.constant 0 : index
    %c0_61 = arith.constant 0 : index
    %75 = vector.load %arg11[%c1_59, %c0_60, %c0_61] : memref<4x8x8xf32, #tpu.memory_space<vmem>>, vector<1x8x8xf32>
    %76 = vector.shape_cast %75 : vector<1x8x8xf32> to vector<8x8xf32>
    %77 = vector.shape_cast %74 : vector<8x8xf32> to vector<1x8x8xf32>
    tpu.vector_store %arg11[%c1_59, %c0_60, %c0_61], %77 {strides = array<i32>} : memref<4x8x8xf32, #tpu.memory_space<vmem>>, vector<1x8x8xf32>,
    %c1_62 = arith.constant 1 : index
    %c0_63 = arith.constant 0 : index
    %c0_64 = arith.constant 0 : index
    %78 = vector.load %arg9[%c1_62, %c0_63, %c0_64] : memref<4x8x1xf32, #tpu.memory_space<vmem>>, vector<1x8x1xf32>
    %79 = vector.shape_cast %78 : vector<1x8x1xf32> to vector<8x1xf32>
    %80 = vector.shape_cast %53 : vector<8x1xf32> to vector<1x8x1xf32>
    tpu.vector_store %arg9[%c1_62, %c0_63, %c0_64], %80 {strides = array<i32>} : memref<4x8x1xf32, #tpu.memory_space<vmem>>, vector<1x8x1xf32>,
    %c0_65 = arith.constant 0 : index
    %c0_66 = arith.constant 0 : index
    %c0_67 = arith.constant 0 : index
    %c16 = arith.constant 16 : index
    %81 = vector.load %arg3[%c0_65, %c0_66, %c0_67, %c16] : memref<1x1x8x32xbf16, #tpu.memory_space<vmem>>, vector<1x1x8x8xbf16>
    %82 = vector.shape_cast %81 : vector<1x1x8x8xbf16> to vector<8x8xbf16>
    %c0_68 = arith.constant 0 : index
    %c0_69 = arith.constant 0 : index
    %c0_70 = arith.constant 0 : index
    %c16_71 = arith.constant 16 : index
    %83 = vector.load %arg4[%c0_68, %c0_69, %c0_70, %c16_71] : memref<1x1x8x32xbf16, #tpu.memory_space<vmem>>, vector<1x1x8x8xbf16>
    %84 = vector.shape_cast %83 : vector<1x1x8x8xbf16> to vector<8x8xbf16>
    %c0_72 = arith.constant 0 : index
    %c0_73 = arith.constant 0 : index
    %c0_74 = arith.constant 0 : index
    %c16_75 = arith.constant 16 : index
    %85 = vector.load %arg5[%c0_72, %c0_73, %c0_74, %c16_75] : memref<1x1x8x32xbf16, #tpu.memory_space<vmem>>, vector<1x1x8x8xbf16>
    %86 = vector.shape_cast %85 : vector<1x1x8x8xbf16> to vector<8x8xbf16>
    %cst_76 = arith.constant dense<0.000000e+00> : vector<8x8xf32>
    %87 = tpu.matmul %82, %84, %cst_76 {dimension_numbers = #tpu.dot_dimension_numbers<[1], [1], [0], [0], [0, 0, 1, 0], [], []>} : vector<8x8xbf16>, vector<8x8xbf16>, vector<8x8xf32> -> vector<8x8xf32>
    %c2 = arith.constant 2 : index
    %c0_77 = arith.constant 0 : index
    %c0_78 = arith.constant 0 : index
    %88 = vector.load %arg9[%c2, %c0_77, %c0_78] : memref<4x8x1xf32, #tpu.memory_space<vmem>>, vector<1x8x1xf32>
    %89 = vector.shape_cast %88 : vector<1x8x1xf32> to vector<8x1xf32>
    %cst_79 = arith.constant dense<0xFF800000> : vector<8xf32>
    %90 = vector.multi_reduction <maximumf>, %87, %cst_79 [1] : vector<8x8xf32> to vector<8xf32>
    %91 = vector.shape_cast %90 : vector<8xf32> to vector<8x1xf32>
    %92 = arith.maximumf %89, %91 : vector<8x1xf32>
    %93 = arith.subf %89, %92 : vector<8x1xf32>
    %94 = math.exp %93 : vector<8x1xf32>
    %95 = vector.broadcast %92 : vector<8x1xf32> to vector<8x8xf32>
    %96 = arith.subf %87, %95 : vector<8x8xf32>
    %97 = math.exp %96 : vector<8x8xf32>
    %c2_80 = arith.constant 2 : index
    %c0_81 = arith.constant 0 : index
    %c0_82 = arith.constant 0 : index
    %98 = vector.load %arg10[%c2_80, %c0_81, %c0_82] : memref<4x8x1xf32, #tpu.memory_space<vmem>>, vector<1x8x1xf32>
    %99 = vector.shape_cast %98 : vector<1x8x1xf32> to vector<8x1xf32>
    %100 = arith.mulf %94, %99 : vector<8x1xf32>
    %cst_83 = arith.constant dense<0.000000e+00> : vector<8xf32>
    %101 = vector.multi_reduction <add>, %97, %cst_83 [1] : vector<8x8xf32> to vector<8xf32>
    %102 = vector.shape_cast %101 : vector<8xf32> to vector<8x1xf32>
    %103 = arith.addf %100, %102 : vector<8x1xf32>
    %c2_84 = arith.constant 2 : index
    %c0_85 = arith.constant 0 : index
    %c0_86 = arith.constant 0 : index
    %104 = vector.load %arg10[%c2_84, %c0_85, %c0_86] : memref<4x8x1xf32, #tpu.memory_space<vmem>>, vector<1x8x1xf32>
    %105 = vector.shape_cast %104 : vector<1x8x1xf32> to vector<8x1xf32>
    %106 = vector.shape_cast %103 : vector<8x1xf32> to vector<1x8x1xf32>
    tpu.vector_store %arg10[%c2_84, %c0_85, %c0_86], %106 {strides = array<i32>} : memref<4x8x1xf32, #tpu.memory_space<vmem>>, vector<1x8x1xf32>,
    %c2_87 = arith.constant 2 : index
    %c0_88 = arith.constant 0 : index
    %c0_89 = arith.constant 0 : index
    %107 = vector.load %arg11[%c2_87, %c0_88, %c0_89] : memref<4x8x8xf32, #tpu.memory_space<vmem>>, vector<1x8x8xf32>
    %108 = vector.shape_cast %107 : vector<1x8x8xf32> to vector<8x8xf32>
    %109 = vector.broadcast %94 : vector<8x1xf32> to vector<8x8xf32>
    %110 = arith.mulf %109, %108 : vector<8x8xf32>
    %111 = arith.truncf %97 : vector<8x8xf32> to vector<8x8xbf16>
    %cst_90 = arith.constant dense<0.000000e+00> : vector<8x8xf32>
    %112 = tpu.matmul %111, %86, %cst_90 {dimension_numbers = #tpu.dot_dimension_numbers<[1], [0], [0], [1], [0, 0, 1, 1], [], []>} : vector<8x8xbf16>, vector<8x8xbf16>, vector<8x8xf32> -> vector<8x8xf32>
    %113 = arith.addf %110, %112 : vector<8x8xf32>
    %c2_91 = arith.constant 2 : index
    %c0_92 = arith.constant 0 : index
    %c0_93 = arith.constant 0 : index
    %114 = vector.load %arg11[%c2_91, %c0_92, %c0_93] : memref<4x8x8xf32, #tpu.memory_space<vmem>>, vector<1x8x8xf32>
    %115 = vector.shape_cast %114 : vector<1x8x8xf32> to vector<8x8xf32>
    %116 = vector.shape_cast %113 : vector<8x8xf32> to vector<1x8x8xf32>
    tpu.vector_store %arg11[%c2_91, %c0_92, %c0_93], %116 {strides = array<i32>} : memref<4x8x8xf32, #tpu.memory_space<vmem>>, vector<1x8x8xf32>,
    %c2_94 = arith.constant 2 : index
    %c0_95 = arith.constant 0 : index
    %c0_96 = arith.constant 0 : index
    %117 = vector.load %arg9[%c2_94, %c0_95, %c0_96] : memref<4x8x1xf32, #tpu.memory_space<vmem>>, vector<1x8x1xf32>
    %118 = vector.shape_cast %117 : vector<1x8x1xf32> to vector<8x1xf32>
    %119 = vector.shape_cast %92 : vector<8x1xf32> to vector<1x8x1xf32>
    tpu.vector_store %arg9[%c2_94, %c0_95, %c0_96], %119 {strides = array<i32>} : memref<4x8x1xf32, #tpu.memory_space<vmem>>, vector<1x8x1xf32>,
    %c0_97 = arith.constant 0 : index
    %c0_98 = arith.constant 0 : index
    %c0_99 = arith.constant 0 : index
    %c24 = arith.constant 24 : index
    %120 = vector.load %arg3[%c0_97, %c0_98, %c0_99, %c24] : memref<1x1x8x32xbf16, #tpu.memory_space<vmem>>, vector<1x1x8x8xbf16>
    %121 = vector.shape_cast %120 : vector<1x1x8x8xbf16> to vector<8x8xbf16>
    %c0_100 = arith.constant 0 : index
    %c0_101 = arith.constant 0 : index
    %c0_102 = arith.constant 0 : index
    %c24_103 = arith.constant 24 : index
    %122 = vector.load %arg4[%c0_100, %c0_101, %c0_102, %c24_103] : memref<1x1x8x32xbf16, #tpu.memory_space<vmem>>, vector<1x1x8x8xbf16>
    %123 = vector.shape_cast %122 : vector<1x1x8x8xbf16> to vector<8x8xbf16>
    %c0_104 = arith.constant 0 : index
    %c0_105 = arith.constant 0 : index
    %c0_106 = arith.constant 0 : index
    %c24_107 = arith.constant 24 : index
    %124 = vector.load %arg5[%c0_104, %c0_105, %c0_106, %c24_107] : memref<1x1x8x32xbf16, #tpu.memory_space<vmem>>, vector<1x1x8x8xbf16>
    %125 = vector.shape_cast %124 : vector<1x1x8x8xbf16> to vector<8x8xbf16>
    %cst_108 = arith.constant dense<0.000000e+00> : vector<8x8xf32>
    %126 = tpu.matmul %121, %123, %cst_108 {dimension_numbers = #tpu.dot_dimension_numbers<[1], [1], [0], [0], [0, 0, 1, 0], [], []>} : vector<8x8xbf16>, vector<8x8xbf16>, vector<8x8xf32> -> vector<8x8xf32>
    %c3 = arith.constant 3 : index
    %c0_109 = arith.constant 0 : index
    %c0_110 = arith.constant 0 : index
    %127 = vector.load %arg9[%c3, %c0_109, %c0_110] : memref<4x8x1xf32, #tpu.memory_space<vmem>>, vector<1x8x1xf32>
    %128 = vector.shape_cast %127 : vector<1x8x1xf32> to vector<8x1xf32>
    %cst_111 = arith.constant dense<0xFF800000> : vector<8xf32>
    %129 = vector.multi_reduction <maximumf>, %126, %cst_111 [1] : vector<8x8xf32> to vector<8xf32>
    %130 = vector.shape_cast %129 : vector<8xf32> to vector<8x1xf32>
    %131 = arith.maximumf %128, %130 : vector<8x1xf32>
    %132 = arith.subf %128, %131 : vector<8x1xf32>
    %133 = math.exp %132 : vector<8x1xf32>
    %134 = vector.broadcast %131 : vector<8x1xf32> to vector<8x8xf32>
    %135 = arith.subf %126, %134 : vector<8x8xf32>
    %136 = math.exp %135 : vector<8x8xf32>
    %c3_112 = arith.constant 3 : index
    %c0_113 = arith.constant 0 : index
    %c0_114 = arith.constant 0 : index
    %137 = vector.load %arg10[%c3_112, %c0_113, %c0_114] : memref<4x8x1xf32, #tpu.memory_space<vmem>>, vector<1x8x1xf32>
    %138 = vector.shape_cast %137 : vector<1x8x1xf32> to vector<8x1xf32>
    %139 = arith.mulf %133, %138 : vector<8x1xf32>
    %cst_115 = arith.constant dense<0.000000e+00> : vector<8xf32>
    %140 = vector.multi_reduction <add>, %136, %cst_115 [1] : vector<8x8xf32> to vector<8xf32>
    %141 = vector.shape_cast %140 : vector<8xf32> to vector<8x1xf32>
    %142 = arith.addf %139, %141 : vector<8x1xf32>
    %c3_116 = arith.constant 3 : index
    %c0_117 = arith.constant 0 : index
    %c0_118 = arith.constant 0 : index
    %143 = vector.load %arg10[%c3_116, %c0_117, %c0_118] : memref<4x8x1xf32, #tpu.memory_space<vmem>>, vector<1x8x1xf32>
    %144 = vector.shape_cast %143 : vector<1x8x1xf32> to vector<8x1xf32>
    %145 = vector.shape_cast %142 : vector<8x1xf32> to vector<1x8x1xf32>
    tpu.vector_store %arg10[%c3_116, %c0_117, %c0_118], %145 {strides = array<i32>} : memref<4x8x1xf32, #tpu.memory_space<vmem>>, vector<1x8x1xf32>,
    %c3_119 = arith.constant 3 : index
    %c0_120 = arith.constant 0 : index
    %c0_121 = arith.constant 0 : index
    %146 = vector.load %arg11[%c3_119, %c0_120, %c0_121] : memref<4x8x8xf32, #tpu.memory_space<vmem>>, vector<1x8x8xf32>
    %147 = vector.shape_cast %146 : vector<1x8x8xf32> to vector<8x8xf32>
    %148 = vector.broadcast %133 : vector<8x1xf32> to vector<8x8xf32>
    %149 = arith.mulf %148, %147 : vector<8x8xf32>
    %150 = arith.truncf %136 : vector<8x8xf32> to vector<8x8xbf16>
    %cst_122 = arith.constant dense<0.000000e+00> : vector<8x8xf32>
    %151 = tpu.matmul %150, %125, %cst_122 {dimension_numbers = #tpu.dot_dimension_numbers<[1], [0], [0], [1], [0, 0, 1, 1], [], []>} : vector<8x8xbf16>, vector<8x8xbf16>, vector<8x8xf32> -> vector<8x8xf32>
    %152 = arith.addf %149, %151 : vector<8x8xf32>
    %c3_123 = arith.constant 3 : index
    %c0_124 = arith.constant 0 : index
    %c0_125 = arith.constant 0 : index
    %153 = vector.load %arg11[%c3_123, %c0_124, %c0_125] : memref<4x8x8xf32, #tpu.memory_space<vmem>>, vector<1x8x8xf32>
    %154 = vector.shape_cast %153 : vector<1x8x8xf32> to vector<8x8xf32>
    %155 = vector.shape_cast %152 : vector<8x8xf32> to vector<1x8x8xf32>
    tpu.vector_store %arg11[%c3_123, %c0_124, %c0_125], %155 {strides = array<i32>} : memref<4x8x8xf32, #tpu.memory_space<vmem>>, vector<1x8x8xf32>,
    %c3_126 = arith.constant 3 : index
    %c0_127 = arith.constant 0 : index
    %c0_128 = arith.constant 0 : index
    %156 = vector.load %arg9[%c3_126, %c0_127, %c0_128] : memref<4x8x1xf32, #tpu.memory_space<vmem>>, vector<1x8x1xf32>
    %157 = vector.shape_cast %156 : vector<1x8x1xf32> to vector<8x1xf32>
    %158 = vector.shape_cast %131 : vector<8x1xf32> to vector<1x8x1xf32>
    tpu.vector_store %arg9[%c3_126, %c0_127, %c0_128], %158 {strides = array<i32>} : memref<4x8x1xf32, #tpu.memory_space<vmem>>, vector<1x8x1xf32>,
    %c0_i32_129 = arith.constant 0 : i32
    %159 = arith.cmpi eq, %arg2, %c0_i32_129 : i32
    %160 = arith.extui %159 : i1 to i32
    %c0_i32_130 = arith.constant 0 : i32
    %161 = arith.cmpi ne, %160, %c0_i32_130 : i32
    scf.if %161 {
      %c0_131 = arith.constant 0 : index
      %c0_132 = arith.constant 0 : index
      %c0_133 = arith.constant 0 : index
      %162 = vector.load %arg10[%c0_131, %c0_132, %c0_133] : memref<4x8x1xf32, #tpu.memory_space<vmem>>, vector<1x8x1xf32>
      %163 = vector.shape_cast %162 : vector<1x8x1xf32> to vector<8x1xf32>
      %164 = tpu.reciprocal %163 {approx = true} : vector<8x1xf32> -> vector<8x1xf32>
      %c0_134 = arith.constant 0 : index
      %c0_135 = arith.constant 0 : index
      %c0_136 = arith.constant 0 : index
      %165 = vector.load %arg11[%c0_134, %c0_135, %c0_136] : memref<4x8x8xf32, #tpu.memory_space<vmem>>, vector<1x8x8xf32>
      %166 = vector.shape_cast %165 : vector<1x8x8xf32> to vector<8x8xf32>
      %167 = vector.broadcast %164 : vector<8x1xf32> to vector<8x8xf32>
      %168 = arith.mulf %166, %167 : vector<8x8xf32>
      %c1_137 = arith.constant 1 : index
      %c0_138 = arith.constant 0 : index
      %c0_139 = arith.constant 0 : index
      %169 = vector.load %arg10[%c1_137, %c0_138, %c0_139] : memref<4x8x1xf32, #tpu.memory_space<vmem>>, vector<1x8x1xf32>
      %170 = vector.shape_cast %169 : vector<1x8x1xf32> to vector<8x1xf32>
      %171 = tpu.reciprocal %170 {approx = true} : vector<8x1xf32> -> vector<8x1xf32>
      %c1_140 = arith.constant 1 : index
      %c0_141 = arith.constant 0 : index
      %c0_142 = arith.constant 0 : index
      %172 = vector.load %arg11[%c1_140, %c0_141, %c0_142] : memref<4x8x8xf32, #tpu.memory_space<vmem>>, vector<1x8x8xf32>
      %173 = vector.shape_cast %172 : vector<1x8x8xf32> to vector<8x8xf32>
      %174 = vector.broadcast %171 : vector<8x1xf32> to vector<8x8xf32>
      %175 = arith.mulf %173, %174 : vector<8x8xf32>
      %c2_143 = arith.constant 2 : index
      %c0_144 = arith.constant 0 : index
      %c0_145 = arith.constant 0 : index
      %176 = vector.load %arg10[%c2_143, %c0_144, %c0_145] : memref<4x8x1xf32, #tpu.memory_space<vmem>>, vector<1x8x1xf32>
      %177 = vector.shape_cast %176 : vector<1x8x1xf32> to vector<8x1xf32>
      %178 = tpu.reciprocal %177 {approx = true} : vector<8x1xf32> -> vector<8x1xf32>
      %c2_146 = arith.constant 2 : index
      %c0_147 = arith.constant 0 : index
      %c0_148 = arith.constant 0 : index
      %179 = vector.load %arg11[%c2_146, %c0_147, %c0_148] : memref<4x8x8xf32, #tpu.memory_space<vmem>>, vector<1x8x8xf32>
      %180 = vector.shape_cast %179 : vector<1x8x8xf32> to vector<8x8xf32>
      %181 = vector.broadcast %178 : vector<8x1xf32> to vector<8x8xf32>
      %182 = arith.mulf %180, %181 : vector<8x8xf32>
      %c3_149 = arith.constant 3 : index
      %c0_150 = arith.constant 0 : index
      %c0_151 = arith.constant 0 : index
      %183 = vector.load %arg10[%c3_149, %c0_150, %c0_151] : memref<4x8x1xf32, #tpu.memory_space<vmem>>, vector<1x8x1xf32>
      %184 = vector.shape_cast %183 : vector<1x8x1xf32> to vector<8x1xf32>
      %185 = tpu.reciprocal %184 {approx = true} : vector<8x1xf32> -> vector<8x1xf32>
      %c3_152 = arith.constant 3 : index
      %c0_153 = arith.constant 0 : index
      %c0_154 = arith.constant 0 : index
      %186 = vector.load %arg11[%c3_152, %c0_153, %c0_154] : memref<4x8x8xf32, #tpu.memory_space<vmem>>, vector<1x8x8xf32>
      %187 = vector.shape_cast %186 : vector<1x8x8xf32> to vector<8x8xf32>
      %188 = vector.broadcast %185 : vector<8x1xf32> to vector<8x8xf32>
      %189 = arith.mulf %187, %188 : vector<8x8xf32>
      %190 = tpu.concatenate %168, %175, %182, %189 in 1 : vector<8x8xf32>, vector<8x8xf32>, vector<8x8xf32>, vector<8x8xf32> -> vector<8x32xf32>
      %191 = arith.truncf %190 : vector<8x32xf32> to vector<8x32xbf16>
      %c0_155 = arith.constant 0 : index
      %c0_156 = arith.constant 0 : index
      %192 = vector.load %arg6[%c0_155, %c0_156] : memref<32x32xbf16, #tpu.memory_space<vmem>>, vector<32x32xbf16>
      %cst_157 = arith.constant dense<0.000000e+00> : vector<8x32xf32>
      %193 = tpu.matmul %191, %192, %cst_157 {dimension_numbers = #tpu.dot_dimension_numbers<[1], [0], [0], [1], [0, 0, 1, 1], [], []>} : vector<8x32xbf16>, vector<32x32xbf16>, vector<8x32xf32> -> vector<8x32xf32>
      %c0_158 = arith.constant 0 : index
      %c0_159 = arith.constant 0 : index
      %194 = vector.load %arg7[%c0_158, %c0_159] : memref<1x32xf32, #tpu.memory_space<vmem>>, vector<1x32xf32>
      %195 = vector.broadcast %194 : vector<1x32xf32> to vector<8x32xf32>
      %196 = arith.addf %193, %195 : vector<8x32xf32>
      %c0_160 = arith.constant 0 : index
      %c0_161 = arith.constant 0 : index
      %c0_162 = arith.constant 0 : index
      %197 = vector.load %arg8[%c0_160, %c0_161, %c0_162] : memref<1x8x32xf32, #tpu.memory_space<vmem>>, vector<1x8x32xf32>
      %198 = vector.shape_cast %197 : vector<1x8x32xf32> to vector<8x32xf32>
      %199 = vector.shape_cast %196 : vector<8x32xf32> to vector<1x8x32xf32>
      tpu.vector_store %arg8[%c0_160, %c0_161, %c0_162], %199 {strides = array<i32>} : memref<1x8x32xf32, #tpu.memory_space<vmem>>, vector<1x8x32xf32>,
    } else {
    }
    return
  }
  func.func @transform_0(%arg0: i32, %arg1: i32, %arg2: i32) -> (i32, i32, i32, i32) {
    %c0_i32 = arith.constant 0 : i32
    %c0_i32_0 = arith.constant 0 : i32
    %c0_i32_1 = arith.constant 0 : i32
    return %c0_i32, %arg0, %arg1, %c0_i32_0 : i32, i32, i32, i32
  }
  func.func @transform_1(%arg0: i32, %arg1: i32, %arg2: i32) -> (i32, i32, i32, i32) {
    %c1_i32 = arith.constant 1 : i32
    %c0_i32 = arith.constant 0 : i32
    %c0_i32_0 = arith.constant 0 : i32
    return %c1_i32, %arg0, %arg2, %c0_i32 : i32, i32, i32, i32
  }
  func.func @transform_2(%arg0: i32, %arg1: i32, %arg2: i32) -> (i32, i32, i32, i32) {
    %c2_i32 = arith.constant 2 : i32
    %c0_i32 = arith.constant 0 : i32
    %c0_i32_0 = arith.constant 0 : i32
    return %c2_i32, %arg0, %arg2, %c0_i32 : i32, i32, i32, i32
  }
  func.func @transform_3(%arg0: i32, %arg1: i32, %arg2: i32) -> (i32, i32) {
    %c0_i32 = arith.constant 0 : i32
    %c0_i32_0 = arith.constant 0 : i32
    %c0_i32_1 = arith.constant 0 : i32
    return %c0_i32, %c0_i32_0 : i32, i32
  }
  func.func @transform_4(%arg0: i32, %arg1: i32, %arg2: i32) -> (i32, i32) {
    %c0_i32 = arith.constant 0 : i32
    %c0_i32_0 = arith.constant 0 : i32
    %c0_i32_1 = arith.constant 0 : i32
    return %c0_i32, %c0_i32_0 : i32, i32
  }
  func.func @transform_5(%arg0: i32, %arg1: i32, %arg2: i32) -> (i32, i32, i32) {
    %c0_i32 = arith.constant 0 : i32
    %c0_i32_0 = arith.constant 0 : i32
    return %arg0, %arg1, %c0_i32 : i32, i32, i32
  }
}

</mosaic_0001>

<llo_original>
// kernel: attention_forward.2
$region0: #{attention_forward.2}
  #allocation0 [shape = 'u32[]', space=smem, size = 0x4, offset = 0x4, fixed_abs, tag = 'smem constant byte address 0x4 - core index']
  #allocation1 [shape = 'u32[72,128]{1,0:T(1,128)}', space=vmem, size = 0x9000, scoped, tag = 'internal scratch']
  %s0 = inlined_call_operand.vmem [shape: bf16[16,32], index: 0, kind: input, shape index: {}]
  %s1 = inlined_call_operand.vmem [shape: bf16[3,32,32], index: 1, kind: input, shape index: {}]
  %s2 = inlined_call_operand.vmem [shape: bf16[3,16,32], index: 2, kind: output, shape index: {}]
  %s3 = sld [smem:[#allocation0]]
  $region41: #{attention_forward.2} parent=0
    _
  %s5 = ssub.s32 1, %s3
  %s6 = scalar_select 0, %s5, %s3
  loop: start=0, step=1, limit=5
  $region2: #{attention_forward.2} parent=0 // loop_pre_header
    _
  $region3: #{attention_forward.2} parent=0 // loop_header
    %s8 = sphi 0, %s12
    %p9 = scmp.ge.s32.totalorder %s8, 5
    %s15 = sphi 0, %s27
    %s16 = sphi 0, %s23
    %s17 = sphi 0, %s15
    %s18 = sphi 0, %s16
    %s19 = sphi 0, %s17
    %s20 = sphi 0, %s18
    %s30 = sphi 0, %s32
    %s33 = sphi 0, %s30
    %s34 = sphi 0, %s33
    %s50 = sphi 0, %s34
    %s56 = sphi 0, %s58
    %s59 = sphi 0, %s56
    %s60 = sphi 0, %s59
    %s76 = sphi 0, %s60
    %s84 = sphi 0, %s86
    %s87 = sphi 0, %s84
    %s88 = sphi 0, %s87
    %s104 = sphi 0, %s88
  $region4: #{attention_forward.2} parent=0 // loop_header_branch
    %11 = sbr.rel (%p9) target = $region8
  $region5: #{attention_forward.2} parent=0 // loop_body
    %s13 = ssub.s32 %s8, 1
    %s14 = ssub.s32 %s8, 2
    %s21 = sadd.s32 1, %s16
    %p22 = scmp.ge.s32.totalorder %s21, 3
    %s23 = scalar_select %p22, 0, %s21
    %s24 = sadd.s32 1, %s15
    %s25 = scalar_select %p22, %s24, %s15
    %p26 = scmp.ge.s32.totalorder %s25, 1
    %s27 = scalar_select %p26, 0, %s25
    %s28 = ssub.s32 %s15, %s27
    %p29 = scmp.eq.s32.totalorder %s28, 0
    %s31 = sadd.s32 %s30, 1
    %s32 = scalar_select %p29, %s30, %s31
    %p35 = pneg %p29
    %p36 = scmp.eq.s32.totalorder %s8, 2
    %p37 = por %p35, %p36
    %p38 = scmp.ne.s32.totalorder %s30, %s33
    %p39 = scmp.eq.s32.totalorder %s8, 0
    %p40 = por %p38, %p39
    %p41 = scmp.ne.s32.totalorder %s30, %s33
    %p42 = scmp.eq.s32.totalorder %s13, 2
    %p43 = por %p41, %p42
    %p44 = scmp.ne.s32.totalorder %s33, %s34
    %p45 = scmp.eq.s32.totalorder %s13, 0
    %p46 = por %p44, %p45
    %p47 = scmp.ne.s32.totalorder %s33, %s34
    %p48 = scmp.eq.s32.totalorder %s14, 2
    %p49 = por %p47, %p48
    %p51 = scmp.ne.s32.totalorder %s34, %s50
    %p52 = scmp.eq.s32.totalorder %s14, 0
    %p53 = por %p51, %p52
    %s54 = ssub.s32 %s16, %s23
    %p55 = scmp.eq.s32.totalorder %s54, 0
    %s57 = sadd.s32 %s56, 1
    %s58 = scalar_select %p55, %s56, %s57
    %p61 = pneg %p55
    %p62 = scmp.eq.s32.totalorder %s8, 2
    %p63 = por %p61, %p62
    %p64 = scmp.ne.s32.totalorder %s56, %s59
    %p65 = scmp.eq.s32.totalorder %s8, 0
    %p66 = por %p64, %p65
    %p67 = scmp.ne.s32.totalorder %s56, %s59
    %p68 = scmp.eq.s32.totalorder %s13, 2
    %p69 = por %p67, %p68
    %p70 = scmp.ne.s32.totalorder %s59, %s60
    %p71 = scmp.eq.s32.totalorder %s13, 0
    %p72 = por %p70, %p71
    %p73 = scmp.ne.s32.totalorder %s59, %s60
    %p74 = scmp.eq.s32.totalorder %s14, 2
    %p75 = por %p73, %p74
    %p77 = scmp.ne.s32.totalorder %s60, %s76
    %p78 = scmp.eq.s32.totalorder %s14, 0
    %p79 = por %p77, %p78
    %s80 = ssub.s32 %s16, %s23
    %s81 = ssub.s32 %s15, %s27
    %s82 = sor.u32 %s80, %s81
    %p83 = scmp.eq.s32.totalorder %s82, 0
    %s85 = sadd.s32 %s84, 1
    %s86 = scalar_select %p83, %s84, %s85
    %p89 = pneg %p83
    %p90 = scmp.eq.s32.totalorder %s8, 2
    %p91 = por %p89, %p90
    %p92 = scmp.ne.s32.totalorder %s84, %s87
    %p93 = scmp.eq.s32.totalorder %s8, 0
    %p94 = por %p92, %p93
    %p95 = scmp.ne.s32.totalorder %s84, %s87
    %p96 = scmp.eq.s32.totalorder %s13, 2
    %p97 = por %p95, %p96
    %p98 = scmp.ne.s32.totalorder %s87, %s88
    %p99 = scmp.eq.s32.totalorder %s13, 0
    %p100 = por %p98, %p99
    %p101 = scmp.ne.s32.totalorder %s87, %s88
    %p102 = scmp.eq.s32.totalorder %s14, 2
    %p103 = por %p101, %p102
    %p105 = scmp.ne.s32.totalorder %s88, %s104
    %p106 = scmp.eq.s32.totalorder %s14, 0
    %p107 = por %p105, %p106
    %p108 = scmp.le.s32.totalorder 1, %s8
    %p109 = scmp.lt.s32.totalorder %s8, 4
    %p110 = pnand %p108, %p109
    %p111 = pneg %p110
    // Predicated region
    $region9: #{attention_forward.2} parent=5 // pred_check
      _
    $region10: #{attention_forward.2} parent=5 // pred_check_branch
      %113 = sbr.rel (%p110) target = $region12
    $region11: #{attention_forward.2} parent=5 // pred_region
      %s114 = ssub.s32 %s8, 1
      // Predicated region
      $region13: #{attention_forward.2} parent=11 // pred_check
        %p115 = pneg %p46
      $region14: #{attention_forward.2} parent=11 // pred_check_branch
        %117 = sbr.rel (%p115) target = $region16
      $region15: #{attention_forward.2} parent=11 // pred_region
        %s118 = smul.u32 2, %s17
        %p119 = scmp.lt.s32.totalorder %s118, 1
        %s120 = scalar_select %p119, %s118, 1
        %s121 = smul.addr %s120, 4
        %s122 = scalar_lea.vmem %s0, %s121
        %s123 = smul.u32 2, %s17
      $region16: #{attention_forward.2} parent=11 // pred_fallthru
        _
    $region12: #{attention_forward.2} parent=5 // pred_fallthru
      _
    %p124 = scmp.lt.s32.totalorder %s8, 3
    // Predicated region
    $region17: #{attention_forward.2} parent=5 // pred_check
      %p125 = pneg %p124
    $region18: #{attention_forward.2} parent=5 // pred_check_branch
      %127 = sbr.rel (%p125) target = $region20
    $region19: #{attention_forward.2} parent=5 // pred_region
      // Predicated region
      $region21: #{attention_forward.2} parent=19 // pred_check
        %p128 = pneg %p66
      $region22: #{attention_forward.2} parent=19 // pred_check_branch
        %130 = sbr.rel (%p128) target = $region24
      $region23: #{attention_forward.2} parent=19 // pred_region
        %p131 = scmp.lt.s32.totalorder %s16, 2
        %s132 = scalar_select %p131, %s16, 2
        %s133 = smul.addr %s132, 4
        %s134 = smul.addr %s133, 4
        %s135 = scalar_lea.vmem %s1, %s134
      $region24: #{attention_forward.2} parent=19 // pred_fallthru
        _
    $region20: #{attention_forward.2} parent=5 // pred_fallthru
      _
    %p136 = scmp.le.s32.totalorder 1, %s8
    %p137 = scmp.lt.s32.totalorder %s8, 4
    %p138 = pnand %p136, %p137
    %p139 = pneg %p138
    // Predicated region
    $region25: #{attention_forward.2} parent=5 // pred_check
      _
    $region26: #{attention_forward.2} parent=5 // pred_check_branch
      %141 = sbr.rel (%p138) target = $region28
    $region27: #{attention_forward.2} parent=5 // pred_region
      %s142 = ssub.s32 %s8, 1
      %s143 = smul.u32 2, %s17
      %p144 = scmp.lt.s32.totalorder %s143, 1
      %s145 = scalar_select %p144, %s143, 1
      %s146 = smul.addr %s145, 4
      %s147 = scalar_lea.vmem %s0, %s146
      %p148 = pneg %p46
      %p149 = pneg %p43
      %p150 = scmp.lt.s32.totalorder %s18, 2
      %s151 = scalar_select %p150, %s18, 2
      %s152 = smul.addr %s151, 4
      %s153 = smul.addr %s152, 4
      %s154 = scalar_lea.vmem %s1, %s153
      %p155 = pneg %p72
      %p156 = pneg %p69
      %p157 = pneg %p100
      %p158 = pneg %p97
      %s159 = smul.u32 2, %s17
      %p160 = scmp.lt.s32.totalorder %s18, 2
      %s161 = scalar_select %p160, %s18, 2
      %p162 = scmp.lt.s32.totalorder %s159, 1
      %s163 = scalar_select %p162, %s159, 1
      %s164 = smul.addr %s161, 2
      %s165 = sadd.s32 %s163, %s164
      %s166 = smul.addr %s165, 4
      %s167 = scalar_lea.vmem %s2, %s166
      %s168 = smul.u32 2, %s17
      %p169 = scmp.lt.s32.totalorder %s168, 1
      %s170 = scalar_select %p169, %s168, 1
      %s171 = smul.addr %s170, 4
      %s172 = scalar_lea.vmem %s0, %s171
      %s173 = smul.u32 2, %s17
      %p174 = scmp.lt.s32.totalorder %s18, 2
      %s175 = scalar_select %p174, %s18, 2
      %s176 = smul.addr %s175, 4
      %s177 = smul.addr %s176, 4
      %s178 = scalar_lea.vmem %s1, %s177
      %s179 = smul.u32 2, %s17
      %p180 = scmp.lt.s32.totalorder %s18, 2
      %s181 = scalar_select %p180, %s18, 2
      %p182 = scmp.lt.s32.totalorder %s179, 1
      %s183 = scalar_select %p182, %s179, 1
      %s184 = smul.addr %s181, 2
      %s185 = sadd.s32 %s183, %s184
      %s186 = smul.addr %s185, 4
      %s187 = scalar_lea.vmem %s2, %s186
      %s188 = smul.u32 2, %s17
      %v190 = vld [vmem:[%s172] sm:$0xf]
      %v191 = vld [vmem:[%s172 + $0x4] sm:$0xf]
      %v192 = vld [vmem:[%s178] sm:$0xf]
      %v193 = vld [vmem:[%s178 + $0x4] sm:$0xf]
      %v194 = vld [vmem:[%s178 + $0x8] sm:$0xf]
      %v195 = vld [vmem:[%s178 + $0xc] sm:$0xf]
      %v198 = vunpack.c.l.b16 %v190
      %v199 = vunpack.c.l.b16 %v191
      %v200 = vpack.c.b16 %v199, %v198
      %v205 = vunpack.c.l.b16 %v192
      %v206 = vunpack.c.l.b16 %v193
      %v207 = vunpack.c.l.b16 %v194
      %v208 = vunpack.c.l.b16 %v195
      %v209 = vpack.c.b16 %v206, %v205
      %v210 = vpack.c.b16 %v208, %v207
      %vm213 = vcmask 261120
      %v215 = vsel %vm213, %v200, 0
      %217 = vmatpush.bf16.msra.mxu0 0
      %218 = vmatpush.bf16.msra.mxu0 0
      %219 = vmatpush.bf16.msra.mxu0 0
      %220 = vmatpush.bf16.msra.mxu0 0
      %221 = vmatpush.bf16.msra.mxu0 0
      %222 = vmatpush.bf16.msra.mxu0 0
      %223 = vmatpush.bf16.msra.mxu0 %v210
      %224 = vmatpush.bf16.msra.mxu0 %v209
      %225 = vmatmul.bf16.gmra.mxu0 %v215
      %v226 = vpop.f32.mrf.mxu0
      %v227 = vadd.f32 0.0, %v226
      %v228 = vpop.f32.mrf.mxu0
      %v229 = vadd.f32 0.0, %v228
      %230 = vdwg.mxu0
      %p231 = scmp.eq.s32.totalorder %s18, 0
      %s232 = scalar_select %p231, 0.35355338, 1.0
      %v233 = vstv %s232
      %v234 = vmul.f32 %v227, %v233
      %v235 = vmul.f32 %v229, %v233
      %v236 = vpack.c.bf16 %v234, %v234
      %v237 = vpack.c.bf16 %v235, %v235
      %vm238 = vcmask 257024
      %239 = vst.msk [vmem:[%s187] sm:$0xf] %vm238, %v236
      %240 = vst.msk [vmem:[%s187 + $0x4] sm:$0xf] %vm238, %v237
      %s241 = smul.u32 2, %s17
      %p242 = scmp.lt.s32.totalorder %s18, 2
      %s243 = scalar_select %p242, %s18, 2
      %p244 = scmp.lt.s32.totalorder %s241, 1
      %s245 = scalar_select %p244, %s241, 1
      %s246 = smul.addr %s243, 2
      %s247 = sadd.s32 %s245, %s246
      %s248 = smul.addr %s247, 4
      %s249 = scalar_lea.vmem %s2, %s248
      // Predicated region
      $region29: #{attention_forward.2} parent=27 // pred_check
        %p250 = pneg %p97
      $region30: #{attention_forward.2} parent=27 // pred_check_branch
        %252 = sbr.rel (%p250) target = $region32
      $region31: #{attention_forward.2} parent=27 // pred_region
        %s253 = smul.u32 2, %s17
      $region32: #{attention_forward.2} parent=27 // pred_fallthru
        _
    $region28: #{attention_forward.2} parent=5 // pred_fallthru
      _
    %p254 = scmp.le.s32.totalorder 2, %s8
    // Predicated region
    $region33: #{attention_forward.2} parent=5 // pred_check
      %p255 = pneg %p254
    $region34: #{attention_forward.2} parent=5 // pred_check_branch
      %257 = sbr.rel (%p255) target = $region36
    $region35: #{attention_forward.2} parent=5 // pred_region
      %s258 = ssub.s32 %s8, 2
      // Predicated region
      $region37: #{attention_forward.2} parent=35 // pred_check
        %p259 = pneg %p103
      $region38: #{attention_forward.2} parent=35 // pred_check_branch
        %261 = sbr.rel (%p259) target = $region40
      $region39: #{attention_forward.2} parent=35 // pred_region
        %s262 = smul.u32 2, %s19
        %p263 = scmp.lt.s32.totalorder %s20, 2
        %s264 = scalar_select %p263, %s20, 2
        %p265 = scmp.lt.s32.totalorder %s262, 1
        %s266 = scalar_select %p265, %s262, 1
        %s267 = smul.addr %s264, 2
        %s268 = sadd.s32 %s266, %s267
        %s269 = smul.addr %s268, 4
        %s270 = scalar_lea.vmem %s2, %s269
      $region40: #{attention_forward.2} parent=35 // pred_fallthru
        _
    $region36: #{attention_forward.2} parent=5 // pred_fallthru
      _
  $region6: #{attention_forward.2} parent=0 // loop_footer
    %s12 = sadd.s32 1, %s8
  $region7: #{attention_forward.2} parent=0 // loop_footer_branch
    %7 = sbr.rel target = $region3
  $region8: #{attention_forward.2} parent=0 // loop_exit
    _

// kernel: attention_forward.3
$region0: #{attention_forward.3}
  #allocation0 [shape = 'u32[]', space=smem, size = 0x4, offset = 0x4, fixed_abs, tag = 'smem constant byte address 0x4 - core index']
  #allocation1 [shape = 'u32[72,128]{1,0:T(1,128)}', space=vmem, size = 0x9000, scoped, tag = 'internal scratch']
  #allocation2 [shape = 'f32[4,8,1]{2,1,0:T(8,128)}', space=vmem, size = 0x4000, scoped, tag = 'scratch operand']
  #allocation3 [shape = 'f32[4,8,1]{2,1,0:T(8,128)}', space=vmem, size = 0x4000, scoped, tag = 'scratch operand']
  #allocation4 [shape = 'f32[4,8,8]{2,1,0:T(8,128)}', space=vmem, size = 0x4000, scoped, tag = 'scratch operand']
  %s0 = inlined_call_operand.vmem [shape: bf16[3,2,8,32], index: 0, kind: input, shape index: {}, may-alias: {0,1,2}]
  %s1 = inlined_call_operand.vmem [shape: bf16[3,2,8,32], index: 1, kind: input, shape index: {}, may-alias: {0,1,2}]
  %s2 = inlined_call_operand.vmem [shape: bf16[3,2,8,32], index: 2, kind: input, shape index: {}, may-alias: {0,1,2}]
  %s3 = inlined_call_operand.vmem [shape: bf16[32,32], index: 3, kind: input, shape index: {}]
  %s4 = inlined_call_operand.vmem [shape: f32[1,32], index: 4, kind: input, shape index: {}]
  %s5 = inlined_call_operand.hbm [shape: f32[2,8,32], index: 5, kind: output, shape index: {}]
  %s6 = sld [smem:[#allocation0]]
  $region61: #{attention_forward.3} parent=0
    _
  %s8 = ssub.s32 1, %s6
  %s9 = scalar_select 0, %s8, %s6
  $region1: #{attention_forward.3} parent=0
    #allocation5 [shape = 'u8[8192]{0}', space=vmem, size = 0x2000, scoped, tag = 'output window, operand 0']
    #allocation6 [shape = 's32[2]{0}', space=sflag, size = 0x8, scoped, tag = 'scoped memory for attention_forward.3']
    %10 = vsyncpa [#allocation6], 0
    %s11 = scalar_lea.sflag [#allocation6], 1
    %12 = vsyncpa %s11, 0
    loop: start=0, step=1, limit=4
    $region2: #{attention_forward.3} parent=1 // loop_pre_header
      _
    $region3: #{attention_forward.3} parent=1 // loop_header
      %s14 = sphi 0, %s18
      %p15 = scmp.ge.s32.totalorder %s14, 4
      %s21 = sphi 0, %s40
      %s22 = sphi 0, %s36
      %s23 = sphi 0, %s32
      %s24 = sphi 0, %s21
      %s25 = sphi 0, %s22
      %s26 = sphi 0, %s23
      %s27 = sphi 0, %s24
      %s28 = sphi 0, %s25
      %s29 = sphi 0, %s26
      %s45 = sphi 0, %s47
      %s48 = sphi 0, %s45
      %s49 = sphi 0, %s48
      %s65 = sphi 0, %s49
      %s73 = sphi 0, %s75
      %s76 = sphi 0, %s73
      %s77 = sphi 0, %s76
      %s93 = sphi 0, %s77
      %s101 = sphi 0, %s103
      %s104 = sphi 0, %s101
      %s105 = sphi 0, %s104
      %s121 = sphi 0, %s105
      %s125 = sphi 0, %s125
      %s127 = sphi 0, %s125
      %s128 = sphi 0, %s127
      %s142 = sphi 0, %s128
      %s146 = sphi 0, %s146
      %s148 = sphi 0, %s146
      %s149 = sphi 0, %s148
      %s163 = sphi 0, %s149
      %s171 = sphi 0, %s173
      %s174 = sphi 0, %s171
      %s175 = sphi 0, %s174
      %s191 = sphi 0, %s175
    $region4: #{attention_forward.3} parent=1 // loop_header_branch
      %17 = sbr.rel (%p15) target = $region8
    $region5: #{attention_forward.3} parent=1 // loop_body
      %s19 = ssub.s32 %s14, 1
      %s20 = ssub.s32 %s14, 2
      %s30 = sadd.s32 1, %s23
      %p31 = scmp.ge.s32.totalorder %s30, 1
      %s32 = scalar_select %p31, 0, %s30
      %s33 = sadd.s32 1, %s22
      %s34 = scalar_select %p31, %s33, %s22
      %p35 = scmp.ge.s32.totalorder %s34, 1
      %s36 = scalar_select %p35, 0, %s34
      %s37 = sadd.s32 1, %s21
      %s38 = scalar_select %p35, %s37, %s21
      %p39 = scmp.ge.s32.totalorder %s38, 2
      %s40 = scalar_select %p39, 0, %s38
      %s41 = ssub.s32 %s21, %s40
      %s42 = ssub.s32 %s22, %s36
      %s43 = sor.u32 %s41, %s42
      %p44 = scmp.eq.s32.totalorder %s43, 0
      %s46 = sadd.s32 %s45, 1
      %s47 = scalar_select %p44, %s45, %s46
      %p50 = pneg %p44
      %p51 = scmp.eq.s32.totalorder %s14, 1
      %p52 = por %p50, %p51
      %p53 = scmp.ne.s32.totalorder %s45, %s48
      %p54 = scmp.eq.s32.totalorder %s14, 0
      %p55 = por %p53, %p54
      %p56 = scmp.ne.s32.totalorder %s45, %s48
      %p57 = scmp.eq.s32.totalorder %s19, 1
      %p58 = por %p56, %p57
      %p59 = scmp.ne.s32.totalorder %s48, %s49
      %p60 = scmp.eq.s32.totalorder %s19, 0
      %p61 = por %p59, %p60
      %p62 = scmp.ne.s32.totalorder %s48, %s49
      %p63 = scmp.eq.s32.totalorder %s20, 1
      %p64 = por %p62, %p63
      %p66 = scmp.ne.s32.totalorder %s49, %s65
      %p67 = scmp.eq.s32.totalorder %s20, 0
      %p68 = por %p66, %p67
      %s69 = ssub.s32 %s21, %s40
      %s70 = ssub.s32 %s23, %s32
      %s71 = sor.u32 %s69, %s70
      %p72 = scmp.eq.s32.totalorder %s71, 0
      %s74 = sadd.s32 %s73, 1
      %s75 = scalar_select %p72, %s73, %s74
      %p78 = pneg %p72
      %p79 = scmp.eq.s32.totalorder %s14, 1
      %p80 = por %p78, %p79
      %p81 = scmp.ne.s32.totalorder %s73, %s76
      %p82 = scmp.eq.s32.totalorder %s14, 0
      %p83 = por %p81, %p82
      %p84 = scmp.ne.s32.totalorder %s73, %s76
      %p85 = scmp.eq.s32.totalorder %s19, 1
      %p86 = por %p84, %p85
      %p87 = scmp.ne.s32.totalorder %s76, %s77
      %p88 = scmp.eq.s32.totalorder %s19, 0
      %p89 = por %p87, %p88
      %p90 = scmp.ne.s32.totalorder %s76, %s77
      %p91 = scmp.eq.s32.totalorder %s20, 1
      %p92 = por %p90, %p91
      %p94 = scmp.ne.s32.totalorder %s77, %s93
      %p95 = scmp.eq.s32.totalorder %s20, 0
      %p96 = por %p94, %p95
      %s97 = ssub.s32 %s21, %s40
      %s98 = ssub.s32 %s23, %s32
      %s99 = sor.u32 %s97, %s98
      %p100 = scmp.eq.s32.totalorder %s99, 0
      %s102 = sadd.s32 %s101, 1
      %s103 = scalar_select %p100, %s101, %s102
      %p106 = pneg %p100
      %p107 = scmp.eq.s32.totalorder %s14, 1
      %p108 = por %p106, %p107
      %p109 = scmp.ne.s32.totalorder %s101, %s104
      %p110 = scmp.eq.s32.totalorder %s14, 0
      %p111 = por %p109, %p110
      %p112 = scmp.ne.s32.totalorder %s101, %s104
      %p113 = scmp.eq.s32.totalorder %s19, 1
      %p114 = por %p112, %p113
      %p115 = scmp.ne.s32.totalorder %s104, %s105
      %p116 = scmp.eq.s32.totalorder %s19, 0
      %p117 = por %p115, %p116
      %p118 = scmp.ne.s32.totalorder %s104, %s105
      %p119 = scmp.eq.s32.totalorder %s20, 1
      %p120 = por %p118, %p119
      %p122 = scmp.ne.s32.totalorder %s105, %s121
      %p123 = scmp.eq.s32.totalorder %s20, 0
      %p124 = por %p122, %p123
      %s126 = sadd.s32 %s125, 1
      %p129 = scmp.eq.s32.totalorder %s14, 1
      %p130 = scmp.ne.s32.totalorder %s125, %s127
      %p131 = scmp.eq.s32.totalorder %s14, 0
      %p132 = por %p130, %p131
      %p133 = scmp.ne.s32.totalorder %s125, %s127
      %p134 = scmp.eq.s32.totalorder %s19, 1
      %p135 = por %p133, %p134
      %p136 = scmp.ne.s32.totalorder %s127, %s128
      %p137 = scmp.eq.s32.totalorder %s19, 0
      %p138 = por %p136, %p137
      %p139 = scmp.ne.s32.totalorder %s127, %s128
      %p140 = scmp.eq.s32.totalorder %s20, 1
      %p141 = por %p139, %p140
      %p143 = scmp.ne.s32.totalorder %s128, %s142
      %p144 = scmp.eq.s32.totalorder %s20, 0
      %p145 = por %p143, %p144
      %s147 = sadd.s32 %s146, 1
      %p150 = scmp.eq.s32.totalorder %s14, 1
      %p151 = scmp.ne.s32.totalorder %s146, %s148
      %p152 = scmp.eq.s32.totalorder %s14, 0
      %p153 = por %p151, %p152
      %p154 = scmp.ne.s32.totalorder %s146, %s148
      %p155 = scmp.eq.s32.totalorder %s19, 1
      %p156 = por %p154, %p155
      %p157 = scmp.ne.s32.totalorder %s148, %s149
      %p158 = scmp.eq.s32.totalorder %s19, 0
      %p159 = por %p157, %p158
      %p160 = scmp.ne.s32.totalorder %s148, %s149
      %p161 = scmp.eq.s32.totalorder %s20, 1
      %p162 = por %p160, %p161
      %p164 = scmp.ne.s32.totalorder %s149, %s163
      %p165 = scmp.eq.s32.totalorder %s20, 0
      %p166 = por %p164, %p165
      %s167 = ssub.s32 %s21, %s40
      %s168 = ssub.s32 %s22, %s36
      %s169 = sor.u32 %s167, %s168
      %p170 = scmp.eq.s32.totalorder %s169, 0
      %s172 = sadd.s32 %s171, 1
      %s173 = scalar_select %p170, %s171, %s172
      %p176 = pneg %p170
      %p177 = scmp.eq.s32.totalorder %s14, 1
      %p178 = por %p176, %p177
      %p179 = scmp.ne.s32.totalorder %s171, %s174
      %p180 = scmp.eq.s32.totalorder %s14, 0
      %p181 = por %p179, %p180
      %p182 = scmp.ne.s32.totalorder %s171, %s174
      %p183 = scmp.eq.s32.totalorder %s19, 1
      %p184 = por %p182, %p183
      %p185 = scmp.ne.s32.totalorder %s174, %s175
      %p186 = scmp.eq.s32.totalorder %s19, 0
      %p187 = por %p185, %p186
      %p188 = scmp.ne.s32.totalorder %s174, %s175
      %p189 = scmp.eq.s32.totalorder %s20, 1
      %p190 = por %p188, %p189
      %p192 = scmp.ne.s32.totalorder %s175, %s191
      %p193 = scmp.eq.s32.totalorder %s20, 0
      %p194 = por %p192, %p193
      %p195 = scmp.le.s32.totalorder 1, %s14
      %p196 = scmp.lt.s32.totalorder %s14, 3
      %p197 = pnand %p195, %p196
      %p198 = pneg %p197
      // Predicated region
      $region9: #{attention_forward.3} parent=5 // pred_check
        _
      $region10: #{attention_forward.3} parent=5 // pred_check_branch
        %200 = sbr.rel (%p197) target = $region12
      $region11: #{attention_forward.3} parent=5 // pred_region
        %s201 = ssub.s32 %s14, 1
        // Predicated region
        $region13: #{attention_forward.3} parent=11 // pred_check
          %p202 = pneg %p138
        $region14: #{attention_forward.3} parent=11 // pred_check_branch
          %204 = sbr.rel (%p202) target = $region16
        $region15: #{attention_forward.3} parent=11 // pred_region
          _
        $region16: #{attention_forward.3} parent=11 // pred_fallthru
          _
        // Predicated region
        $region17: #{attention_forward.3} parent=11 // pred_check
          %p205 = pneg %p159
        $region18: #{attention_forward.3} parent=11 // pred_check_branch
          %207 = sbr.rel (%p205) target = $region20
        $region19: #{attention_forward.3} parent=11 // pred_region
          _
        $region20: #{attention_forward.3} parent=11 // pred_fallthru
          _
      $region12: #{attention_forward.3} parent=5 // pred_fallthru
        _
      %p208 = scmp.lt.s32.totalorder %s14, 2
      // Predicated region
      $region21: #{attention_forward.3} parent=5 // pred_check
        %p209 = pneg %p208
      $region22: #{attention_forward.3} parent=5 // pred_check_branch
        %211 = sbr.rel (%p209) target = $region24
      $region23: #{attention_forward.3} parent=5 // pred_region
        // Predicated region
        $region25: #{attention_forward.3} parent=23 // pred_check
          %p212 = pneg %p55
        $region26: #{attention_forward.3} parent=23 // pred_check_branch
          %214 = sbr.rel (%p212) target = $region28
        $region27: #{attention_forward.3} parent=23 // pred_region
          %p215 = scmp.lt.s32.totalorder %s21, 1
          %s216 = scalar_select %p215, %s21, 1
          %p217 = scmp.lt.s32.totalorder %s22, 0
          %s218 = scalar_select %p217, %s22, 0
          %s219 = sadd.s32 %s218, %s216
          %s220 = smul.addr %s219, 4
          %s221 = scalar_lea.vmem %s0, %s220
        $region28: #{attention_forward.3} parent=23 // pred_fallthru
          _
        // Predicated region
        $region29: #{attention_forward.3} parent=23 // pred_check
          %p222 = pneg %p83
        $region30: #{attention_forward.3} parent=23 // pred_check_branch
          %224 = sbr.rel (%p222) target = $region32
        $region31: #{attention_forward.3} parent=23 // pred_region
          %p225 = scmp.lt.s32.totalorder %s21, 1
          %s226 = scalar_select %p225, %s21, 1
          %p227 = scmp.lt.s32.totalorder %s23, 0
          %s228 = scalar_select %p227, %s23, 0
          %s229 = sadd.s32 %s228, %s226
          %s230 = sadd.s32 %s229, 2
          %s231 = smul.addr %s230, 4
          %s232 = scalar_lea.vmem %s1, %s231
        $region32: #{attention_forward.3} parent=23 // pred_fallthru
          _
        // Predicated region
        $region33: #{attention_forward.3} parent=23 // pred_check
          %p233 = pneg %p111
        $region34: #{attention_forward.3} parent=23 // pred_check_branch
          %235 = sbr.rel (%p233) target = $region36
        $region35: #{attention_forward.3} parent=23 // pred_region
          %p236 = scmp.lt.s32.totalorder %s21, 1
          %s237 = scalar_select %p236, %s21, 1
          %p238 = scmp.lt.s32.totalorder %s23, 0
          %s239 = scalar_select %p238, %s23, 0
          %s240 = sadd.s32 %s239, %s237
          %s241 = sadd.s32 %s240, 4
          %s242 = smul.addr %s241, 4
          %s243 = scalar_lea.vmem %s2, %s242
        $region36: #{attention_forward.3} parent=23 // pred_fallthru
          _
      $region24: #{attention_forward.3} parent=5 // pred_fallthru
        _
      %p244 = scmp.le.s32.totalorder 1, %s14
      %p245 = scmp.lt.s32.totalorder %s14, 3
      %p246 = pnand %p244, %p245
      %p247 = pneg %p246
      // Predicated region
      $region37: #{attention_forward.3} parent=5 // pred_check
        _
      $region38: #{attention_forward.3} parent=5 // pred_check_branch
        %249 = sbr.rel (%p246) target = $region40
      $region39: #{attention_forward.3} parent=5 // pred_region
        %s250 = ssub.s32 %s14, 1
        %p251 = scmp.lt.s32.totalorder %s24, 1
        %s252 = scalar_select %p251, %s24, 1
        %p253 = scmp.lt.s32.totalorder %s25, 0
        %s254 = scalar_select %p253, %s25, 0
        %s255 = sadd.s32 %s254, %s252
        %s256 = smul.addr %s255, 4
        %s257 = scalar_lea.vmem %s0, %s256
        %p258 = pneg %p61
        %p259 = pneg %p58
        %p260 = scmp.lt.s32.totalorder %s24, 1
        %s261 = scalar_select %p260, %s24, 1
        %p262 = scmp.lt.s32.totalorder %s26, 0
        %s263 = scalar_select %p262, %s26, 0
        %s264 = sadd.s32 %s263, %s261
        %s265 = sadd.s32 %s264, 2
        %s266 = smul.addr %s265, 4
        %s267 = scalar_lea.vmem %s1, %s266
        %p268 = pneg %p89
        %p269 = pneg %p86
        %p270 = scmp.lt.s32.totalorder %s24, 1
        %s271 = scalar_select %p270, %s24, 1
        %p272 = scmp.lt.s32.totalorder %s26, 0
        %s273 = scalar_select %p272, %s26, 0
        %s274 = sadd.s32 %s273, %s271
        %s275 = sadd.s32 %s274, 4
        %s276 = smul.addr %s275, 4
        %s277 = scalar_lea.vmem %s2, %s276
        %p278 = pneg %p117
        %p279 = pneg %p114
        %p280 = pneg %p138
        %p281 = pneg %p135
        %p282 = pneg %p159
        %p283 = pneg %p156
        %p284 = pneg %p187
        %p285 = pneg %p184
        %s286 = sand.u32 %s174, 1
        %s287 = scalar_lea.sflag [#allocation6], %s286
        %s288 = sand.u32 %s174, 1
        %s289 = smul.addr %s288, 8
        %s290 = scalar_lea.vmem [#allocation5], %s289
        %p291 = scmp.lt.s32.totalorder %s24, 1
        %s292 = scalar_select %p291, %s24, 1
        %p293 = scmp.lt.s32.totalorder %s25, 0
        %s294 = scalar_select %p293, %s25, 0
        %s295 = sadd.s32 %s294, %s292
        %s296 = smul.addr %s295, 4
        %s297 = scalar_lea.vmem %s0, %s296
        %p298 = scmp.lt.s32.totalorder %s24, 1
        %s299 = scalar_select %p298, %s24, 1
        %p300 = scmp.lt.s32.totalorder %s26, 0
        %s301 = scalar_select %p300, %s26, 0
        %s302 = sadd.s32 %s301, %s299
        %s303 = sadd.s32 %s302, 2
        %s304 = smul.addr %s303, 4
        %s305 = scalar_lea.vmem %s1, %s304
        %p306 = scmp.lt.s32.totalorder %s24, 1
        %s307 = scalar_select %p306, %s24, 1
        %p308 = scmp.lt.s32.totalorder %s26, 0
        %s309 = scalar_select %p308, %s26, 0
        %s310 = sadd.s32 %s309, %s307
        %s311 = sadd.s32 %s310, 4
        %s312 = smul.addr %s311, 4
        %s313 = scalar_lea.vmem %s2, %s312
        %p315 = scmp.eq.s32.totalorder %s26, 0
        // Predicated region
        $region41: #{attention_forward.3} parent=39 // pred_check
          %p316 = pneg %p315
        $region42: #{attention_forward.3} parent=39 // pred_check_branch
          %318 = sbr.rel (%p316) target = $region44
        $region43: #{attention_forward.3} parent=39 // pred_region
          %vm319 = vcmask 7168
          %320 = vst.msk [vmem:[#allocation2] sm:$0xff] %vm319, -inf
          %321 = vst.msk [vmem:[#allocation2 + $0x8] sm:$0xff] %vm319, -inf
          %322 = vst.msk [vmem:[#allocation2 + $0x10] sm:$0xff] %vm319, -inf
          %323 = vst.msk [vmem:[#allocation2 + $0x18] sm:$0xff] %vm319, -inf
          %324 = vst.msk [vmem:[#allocation3] sm:$0xff] %vm319, 0.0
          %325 = vst.msk [vmem:[#allocation3 + $0x8] sm:$0xff] %vm319, 0.0
          %326 = vst.msk [vmem:[#allocation3 + $0x10] sm:$0xff] %vm319, 0.0
          %327 = vst.msk [vmem:[#allocation3 + $0x18] sm:$0xff] %vm319, 0.0
          %vm328 = vcmask 64512
          %329 = vst.msk [vmem:[#allocation4] sm:$0xff] %vm328, 0.0
          %330 = vst.msk [vmem:[#allocation4 + $0x8] sm:$0xff] %vm328, 0.0
          %331 = vst.msk [vmem:[#allocation4 + $0x10] sm:$0xff] %vm328, 0.0
          %332 = vst.msk [vmem:[#allocation4 + $0x18] sm:$0xff] %vm328, 0.0
        $region44: #{attention_forward.3} parent=39 // pred_fallthru
          _
        %v333 = vld [vmem:[%s297] sm:$0xf]
        %v334 = vld [vmem:[%s305] sm:$0xf]
        %v335 = vld [vmem:[%s313] sm:$0xf]
        %vm336 = vcmask 64512
        %v338 = vsel %vm336, %v333, 0
        %v341 = vsel %vm336, %v334, 0
        %343 = vmatpush.bf16.xpose.msra.mxu0 0
        %344 = vmatpush.bf16.xpose.msra.mxu0 0
        %345 = vmatpush.bf16.xpose.msra.mxu0 0
        %346 = vmatpush.bf16.xpose.msra.mxu0 0
        %347 = vmatpush.bf16.xpose.msra.mxu0 0
        %348 = vmatpush.bf16.xpose.msra.mxu0 0
        %349 = vmatpush.bf16.xpose.msra.mxu0 0
        %350 = vmatpush.bf16.xpose.msra.mxu0 %v341
        %351 = vmatmul.bf16.gmra.mxu0 %v338
        %v352 = vpop.f32.mrf.mxu0
        %v353 = vadd.f32 0.0, %v352
        %v354 = vpop.f32.mrf.mxu0
        %355 = vdwg.mxu0
        %v356 = vld [vmem:[#allocation2] sm:$0xff]
        %v357 = vsel %vm336, %v353, -inf
        %358 = vmax.xlane.f32.xlu0 %v357
        %v359 = vpop.xlane.xlu0 %358
        %v360 = vmax.f32 %v356, %v359
        %v361 = vsub.f32 %v356, %v360
        %v362 = vmul.f32 %v361, 1.442695
        %v363 = vpow.pop %v362
        %365 = vset.pattern.permute.xlu0 0
        %366 = vperm.xlu0 %365, %v360
        %v367 = vpop.permute.xlu0 %366
        %v369 = vsub.f32 %v353, %v367
        %v370 = vmul.f32 %v369, 1.442695
        %v371 = vpow.pop %v370
        %v372 = vld [vmem:[#allocation3] sm:$0xff]
        %v373 = vmul.f32 %v363, %v372
        %v374 = vsel %vm336, %v371, 0.0
        %375 = vadd.xlane.f32.xlu0 %v374
        %v376 = vpop.xlane.xlu0 %375
        %v377 = vadd.f32 %v373, %v376
        %vm378 = vcmask 7168
        %379 = vst.msk [vmem:[#allocation3] sm:$0xff] %vm378, %v377
        %v380 = vld [vmem:[#allocation4] sm:$0xff]
        %382 = vset.pattern.permute.xlu0 0
        %383 = vperm.xlu0 %382, %v363
        %v384 = vpop.permute.xlu0 %383
        %v386 = vmul.f32 %v384, %v380
        %v387 = vpack.c.bf16 %v371, %v371
        %v389 = vsel %vm336, %v387, 0
        %vm391 = vcmask 1043456
        %v393 = vsel %vm391, %v335, 0
        %395 = vmatpush.bf16.msra.mxu0 0
        %396 = vmatpush.bf16.msra.mxu0 0
        %397 = vmatpush.bf16.msra.mxu0 0
        %398 = vmatpush.bf16.msra.mxu0 0
        %399 = vmatpush.bf16.msra.mxu0 0
        %400 = vmatpush.bf16.msra.mxu0 0
        %401 = vmatpush.bf16.msra.mxu0 0
        %402 = vmatpush.bf16.msra.mxu0 %v393
        %403 = vmatmul.bf16.gmra.mxu0 %v389
        %v404 = vpop.f32.mrf.mxu0
        %v405 = vadd.f32 0.0, %v404
        %v406 = vpop.f32.mrf.mxu0
        %407 = vdwg.mxu0
        %v408 = vadd.f32 %v386, %v405
        %409 = vst.msk [vmem:[#allocation4] sm:$0xff] %vm336, %v408
        %410 = vst.msk [vmem:[#allocation2] sm:$0xff] %vm378, %v360
        %v411 = vld [vmem:[%s297] sm:$0xf]
        %v412 = vld [vmem:[%s305] sm:$0xf]
        %v413 = vld [vmem:[%s313] sm:$0xf]
        %v415 = vunpack.c.l.b16 %v411
        %v416 = vpack.c.b16 %v415, %v415
        %417 = vrot.lane.b32.xlu0 %v416, 120
        %v418 = vpop.permute.xlu0 %417
        %v420 = vunpack.c.l.b16 %v412
        %v421 = vpack.c.b16 %v420, %v420
        %422 = vrot.lane.b32.xlu0 %v421, 120
        %v423 = vpop.permute.xlu0 %422
        %v425 = vsel %vm336, %v418, 0
        %v428 = vsel %vm336, %v423, 0
        %430 = vmatpush.bf16.xpose.msra.mxu0 0
        %431 = vmatpush.bf16.xpose.msra.mxu0 0
        %432 = vmatpush.bf16.xpose.msra.mxu0 0
        %433 = vmatpush.bf16.xpose.msra.mxu0 0
        %434 = vmatpush.bf16.xpose.msra.mxu0 0
        %435 = vmatpush.bf16.xpose.msra.mxu0 0
        %436 = vmatpush.bf16.xpose.msra.mxu0 0
        %437 = vmatpush.bf16.xpose.msra.mxu0 %v428
        %438 = vmatmul.bf16.gmra.mxu0 %v425
        %v439 = vpop.f32.mrf.mxu0
        %v440 = vadd.f32 0.0, %v439
        %v441 = vpop.f32.mrf.mxu0
        %442 = vdwg.mxu0
        %s443 = scalar_lea.vmem [#allocation2], 8
        %v444 = vld [vmem:[%s443] sm:$0xff]
        %v445 = vsel %vm336, %v440, -inf
        %446 = vmax.xlane.f32.xlu0 %v445
        %v447 = vpop.xlane.xlu0 %446
        %v448 = vmax.f32 %v444, %v447
        %v449 = vsub.f32 %v444, %v448
        %v450 = vmul.f32 %v449, 1.442695
        %v451 = vpow.pop %v450
        %453 = vset.pattern.permute.xlu0 0
        %454 = vperm.xlu0 %453, %v448
        %v455 = vpop.permute.xlu0 %454
        %v457 = vsub.f32 %v440, %v455
        %v458 = vmul.f32 %v457, 1.442695
        %v459 = vpow.pop %v458
        %s460 = scalar_lea.vmem [#allocation3], 8
        %v461 = vld [vmem:[%s460] sm:$0xff]
        %v462 = vmul.f32 %v451, %v461
        %v463 = vsel %vm336, %v459, 0.0
        %464 = vadd.xlane.f32.xlu0 %v463
        %v465 = vpop.xlane.xlu0 %464
        %v466 = vadd.f32 %v462, %v465
        %467 = vst.msk [vmem:[%s460] sm:$0xff] %vm378, %v466
        %s468 = scalar_lea.vmem [#allocation4], 8
        %v469 = vld [vmem:[%s468] sm:$0xff]
        %471 = vset.pattern.permute.xlu0 0
        %472 = vperm.xlu0 %471, %v451
        %v473 = vpop.permute.xlu0 %472
        %v475 = vmul.f32 %v473, %v469
        %v476 = vpack.c.bf16 %v459, %v459
        %v478 = vunpack.c.l.b16 %v413
        %v479 = vpack.c.b16 %v478, %v478
        %480 = vrot.lane.b32.xlu0 %v479, 120
        %v481 = vpop.permute.xlu0 %480
        %v483 = vsel %vm336, %v476, 0
        %v486 = vsel %vm391, %v481, 0
        %488 = vmatpush.bf16.msra.mxu0 0
        %489 = vmatpush.bf16.msra.mxu0 0
        %490 = vmatpush.bf16.msra.mxu0 0
        %491 = vmatpush.bf16.msra.mxu0 0
        %492 = vmatpush.bf16.msra.mxu0 0
        %493 = vmatpush.bf16.msra.mxu0 0
        %494 = vmatpush.bf16.msra.mxu0 0
        %495 = vmatpush.bf16.msra.mxu0 %v486
        %496 = vmatmul.bf16.gmra.mxu0 %v483
        %v497 = vpop.f32.mrf.mxu0
        %v498 = vadd.f32 0.0, %v497
        %v499 = vpop.f32.mrf.mxu0
        %500 = vdwg.mxu0
        %v501 = vadd.f32 %v475, %v498
        %502 = vst.msk [vmem:[%s468] sm:$0xff] %vm336, %v501
        %503 = vst.msk [vmem:[%s443] sm:$0xff] %vm378, %v448
        %v504 = vld [vmem:[%s297] sm:$0xf]
        %v505 = vld [vmem:[%s305] sm:$0xf]
        %v506 = vld [vmem:[%s313] sm:$0xf]
        %v508 = vunpack.c.l.b16 %v504
        %v509 = vpack.c.b16 %v508, %v508
        %510 = vrot.lane.b32.xlu0 %v509, 112
        %v511 = vpop.permute.xlu0 %510
        %v513 = vunpack.c.l.b16 %v505
        %v514 = vpack.c.b16 %v513, %v513
        %515 = vrot.lane.b32.xlu0 %v514, 112
        %v516 = vpop.permute.xlu0 %515
        %v518 = vsel %vm336, %v511, 0
        %v521 = vsel %vm336, %v516, 0
        %523 = vmatpush.bf16.xpose.msra.mxu0 0
        %524 = vmatpush.bf16.xpose.msra.mxu0 0
        %525 = vmatpush.bf16.xpose.msra.mxu0 0
        %526 = vmatpush.bf16.xpose.msra.mxu0 0
        %527 = vmatpush.bf16.xpose.msra.mxu0 0
        %528 = vmatpush.bf16.xpose.msra.mxu0 0
        %529 = vmatpush.bf16.xpose.msra.mxu0 0
        %530 = vmatpush.bf16.xpose.msra.mxu0 %v521
        %531 = vmatmul.bf16.gmra.mxu0 %v518
        %v532 = vpop.f32.mrf.mxu0
        %v533 = vadd.f32 0.0, %v532
        %v534 = vpop.f32.mrf.mxu0
        %535 = vdwg.mxu0
        %s536 = scalar_lea.vmem [#allocation2], 16
        %v537 = vld [vmem:[%s536] sm:$0xff]
        %v538 = vsel %vm336, %v533, -inf
        %539 = vmax.xlane.f32.xlu0 %v538
        %v540 = vpop.xlane.xlu0 %539
        %v541 = vmax.f32 %v537, %v540
        %v542 = vsub.f32 %v537, %v541
        %v543 = vmul.f32 %v542, 1.442695
        %v544 = vpow.pop %v543
        %546 = vset.pattern.permute.xlu0 0
        %547 = vperm.xlu0 %546, %v541
        %v548 = vpop.permute.xlu0 %547
        %v550 = vsub.f32 %v533, %v548
        %v551 = vmul.f32 %v550, 1.442695
        %v552 = vpow.pop %v551
        %s553 = scalar_lea.vmem [#allocation3], 16
        %v554 = vld [vmem:[%s553] sm:$0xff]
        %v555 = vmul.f32 %v544, %v554
        %v556 = vsel %vm336, %v552, 0.0
        %557 = vadd.xlane.f32.xlu0 %v556
        %v558 = vpop.xlane.xlu0 %557
        %v559 = vadd.f32 %v555, %v558
        %560 = vst.msk [vmem:[%s553] sm:$0xff] %vm378, %v559
        %s561 = scalar_lea.vmem [#allocation4], 16
        %v562 = vld [vmem:[%s561] sm:$0xff]
        %564 = vset.pattern.permute.xlu0 0
        %565 = vperm.xlu0 %564, %v544
        %v566 = vpop.permute.xlu0 %565
        %v568 = vmul.f32 %v566, %v562
        %v569 = vpack.c.bf16 %v552, %v552
        %v571 = vunpack.c.l.b16 %v506
        %v572 = vpack.c.b16 %v571, %v571
        %573 = vrot.lane.b32.xlu0 %v572, 112
        %v574 = vpop.permute.xlu0 %573
        %v576 = vsel %vm336, %v569, 0
        %v579 = vsel %vm391, %v574, 0
        %581 = vmatpush.bf16.msra.mxu0 0
        %582 = vmatpush.bf16.msra.mxu0 0
        %583 = vmatpush.bf16.msra.mxu0 0
        %584 = vmatpush.bf16.msra.mxu0 0
        %585 = vmatpush.bf16.msra.mxu0 0
        %586 = vmatpush.bf16.msra.mxu0 0
        %587 = vmatpush.bf16.msra.mxu0 0
        %588 = vmatpush.bf16.msra.mxu0 %v579
        %589 = vmatmul.bf16.gmra.mxu0 %v576
        %v590 = vpop.f32.mrf.mxu0
        %v591 = vadd.f32 0.0, %v590
        %v592 = vpop.f32.mrf.mxu0
        %593 = vdwg.mxu0
        %v594 = vadd.f32 %v568, %v591
        %595 = vst.msk [vmem:[%s561] sm:$0xff] %vm336, %v594
        %596 = vst.msk [vmem:[%s536] sm:$0xff] %vm378, %v541
        %v597 = vld [vmem:[%s297] sm:$0xf]
        %v598 = vld [vmem:[%s305] sm:$0xf]
        %v599 = vld [vmem:[%s313] sm:$0xf]
        %v601 = vunpack.c.l.b16 %v597
        %v602 = vpack.c.b16 %v601, %v601
        %603 = vrot.lane.b32.xlu0 %v602, 104
        %v604 = vpop.permute.xlu0 %603
        %v606 = vunpack.c.l.b16 %v598
        %v607 = vpack.c.b16 %v606, %v606
        %608 = vrot.lane.b32.xlu0 %v607, 104
        %v609 = vpop.permute.xlu0 %608
        %v611 = vsel %vm336, %v604, 0
        %v614 = vsel %vm336, %v609, 0
        %616 = vmatpush.bf16.xpose.msra.mxu0 0
        %617 = vmatpush.bf16.xpose.msra.mxu0 0
        %618 = vmatpush.bf16.xpose.msra.mxu0 0
        %619 = vmatpush.bf16.xpose.msra.mxu0 0
        %620 = vmatpush.bf16.xpose.msra.mxu0 0
        %621 = vmatpush.bf16.xpose.msra.mxu0 0
        %622 = vmatpush.bf16.xpose.msra.mxu0 0
        %623 = vmatpush.bf16.xpose.msra.mxu0 %v614
        %624 = vmatmul.bf16.gmra.mxu0 %v611
        %v625 = vpop.f32.mrf.mxu0
        %v626 = vadd.f32 0.0, %v625
        %v627 = vpop.f32.mrf.mxu0
        %628 = vdwg.mxu0
        %s629 = scalar_lea.vmem [#allocation2], 24
        %v630 = vld [vmem:[%s629] sm:$0xff]
        %v631 = vsel %vm336, %v626, -inf
        %632 = vmax.xlane.f32.xlu0 %v631
        %v633 = vpop.xlane.xlu0 %632
        %v634 = vmax.f32 %v630, %v633
        %v635 = vsub.f32 %v630, %v634
        %v636 = vmul.f32 %v635, 1.442695
        %v637 = vpow.pop %v636
        %639 = vset.pattern.permute.xlu0 0
        %640 = vperm.xlu0 %639, %v634
        %v641 = vpop.permute.xlu0 %640
        %v643 = vsub.f32 %v626, %v641
        %v644 = vmul.f32 %v643, 1.442695
        %v645 = vpow.pop %v644
        %s646 = scalar_lea.vmem [#allocation3], 24
        %v647 = vld [vmem:[%s646] sm:$0xff]
        %v648 = vmul.f32 %v637, %v647
        %v649 = vsel %vm336, %v645, 0.0
        %650 = vadd.xlane.f32.xlu0 %v649
        %v651 = vpop.xlane.xlu0 %650
        %v652 = vadd.f32 %v648, %v651
        %653 = vst.msk [vmem:[%s646] sm:$0xff] %vm378, %v652
        %s654 = scalar_lea.vmem [#allocation4], 24
        %v655 = vld [vmem:[%s654] sm:$0xff]
        %657 = vset.pattern.permute.xlu0 0
        %658 = vperm.xlu0 %657, %v637
        %v659 = vpop.permute.xlu0 %658
        %v661 = vmul.f32 %v659, %v655
        %v662 = vpack.c.bf16 %v645, %v645
        %v664 = vunpack.c.l.b16 %v599
        %v665 = vpack.c.b16 %v664, %v664
        %666 = vrot.lane.b32.xlu0 %v665, 104
        %v667 = vpop.permute.xlu0 %666
        %v669 = vsel %vm336, %v662, 0
        %v672 = vsel %vm391, %v667, 0
        %674 = vmatpush.bf16.msra.mxu0 0
        %675 = vmatpush.bf16.msra.mxu0 0
        %676 = vmatpush.bf16.msra.mxu0 0
        %677 = vmatpush.bf16.msra.mxu0 0
        %678 = vmatpush.bf16.msra.mxu0 0
        %679 = vmatpush.bf16.msra.mxu0 0
        %680 = vmatpush.bf16.msra.mxu0 0
        %681 = vmatpush.bf16.msra.mxu0 %v672
        %682 = vmatmul.bf16.gmra.mxu0 %v669
        %v683 = vpop.f32.mrf.mxu0
        %v684 = vadd.f32 0.0, %v683
        %v685 = vpop.f32.mrf.mxu0
        %686 = vdwg.mxu0
        %v687 = vadd.f32 %v661, %v684
        %688 = vst.msk [vmem:[%s654] sm:$0xff] %vm336, %v687
        %689 = vst.msk [vmem:[%s629] sm:$0xff] %vm378, %v634
        // Predicated region
        $region45: #{attention_forward.3} parent=39 // pred_check
          %p690 = pneg %p315
        $region46: #{attention_forward.3} parent=39 // pred_check_branch
          %692 = sbr.rel (%p690) target = $region48
        $region47: #{attention_forward.3} parent=39 // pred_region
          %v693 = vld [vmem:[#allocation3] sm:$0xff]
          %v694 = vrcp.pop %v693
          %v695 = vld [vmem:[#allocation4] sm:$0xff]
          %697 = vset.pattern.permute.xlu0 0
          %698 = vperm.xlu0 %697, %v694
          %v699 = vpop.permute.xlu0 %698
          %v701 = vmul.f32 %v695, %v699
          %v702 = vld [vmem:[%s460] sm:$0xff]
          %v703 = vrcp.pop %v702
          %v704 = vld [vmem:[%s468] sm:$0xff]
          %706 = vset.pattern.permute.xlu0 0
          %707 = vperm.xlu0 %706, %v703
          %v708 = vpop.permute.xlu0 %707
          %v710 = vmul.f32 %v704, %v708
          %v711 = vld [vmem:[%s553] sm:$0xff]
          %v712 = vrcp.pop %v711
          %v713 = vld [vmem:[%s561] sm:$0xff]
          %715 = vset.pattern.permute.xlu0 0
          %716 = vperm.xlu0 %715, %v712
          %v717 = vpop.permute.xlu0 %716
          %v719 = vmul.f32 %v713, %v717
          %v720 = vld [vmem:[%s646] sm:$0xff]
          %v721 = vrcp.pop %v720
          %v722 = vld [vmem:[%s654] sm:$0xff]
          %724 = vset.pattern.permute.xlu0 0
          %725 = vperm.xlu0 %724, %v721
          %v726 = vpop.permute.xlu0 %725
          %v728 = vmul.f32 %v722, %v726
          %730 = vrot.lane.b32.xlu0 %v710, 8
          %v731 = vpop.permute.xlu0 %730
          %734 = vrot.lane.b32.xlu0 %v719, 16
          %v735 = vpop.permute.xlu0 %734
          %738 = vrot.lane.b32.xlu0 %v728, 24
          %v739 = vpop.permute.xlu0 %738
          %v741 = vsel %vm336, %v701, %v731
          %vm742 = vcmask 130048
          %v743 = vsel %vm742, %v741, %v735
          %vm744 = vcmask 195584
          %v745 = vsel %vm744, %v743, %v739
          %v746 = vpack.c.bf16 %v745, %v745
          %v747 = vld [vmem:[%s3] sm:$0xf]
          %v748 = vld [vmem:[%s3 + $0x4] sm:$0xf]
          %v749 = vld [vmem:[%s3 + $0x8] sm:$0xf]
          %v750 = vld [vmem:[%s3 + $0xc] sm:$0xf]
          %v751 = vld [vmem:[%s4] sm:$0x1]
          %v753 = vperm.slane %v751, 0
          %v759 = vunpack.c.l.b16 %v747
          %v760 = vunpack.c.l.b16 %v748
          %v761 = vunpack.c.l.b16 %v749
          %v762 = vunpack.c.l.b16 %v750
          %v763 = vpack.c.b16 %v760, %v759
          %v764 = vpack.c.b16 %v762, %v761
          %vm767 = vcmask 261120
          %v769 = vsel %vm767, %v746, 0
          %771 = vmatpush.bf16.msra.mxu0 0
          %772 = vmatpush.bf16.msra.mxu0 0
          %773 = vmatpush.bf16.msra.mxu0 0
          %774 = vmatpush.bf16.msra.mxu0 0
          %775 = vmatpush.bf16.msra.mxu0 0
          %776 = vmatpush.bf16.msra.mxu0 0
          %777 = vmatpush.bf16.msra.mxu0 %v764
          %778 = vmatpush.bf16.msra.mxu0 %v763
          %779 = vmatmul.bf16.gmra.mxu0 %v769
          %v780 = vpop.f32.mrf.mxu0
          %v781 = vadd.f32 %v753, %v780
          %v782 = vpop.f32.mrf.mxu0
          %783 = vdwg.mxu0
          %784 = vst.msk [vmem:[%s290] sm:$0xff] %vm767, %v781
        $region48: #{attention_forward.3} parent=39 // pred_fallthru
          _
        %s785 = sand.u32 %s174, 1
        %s786 = scalar_lea.sflag [#allocation6], %s785
        %s787 = sand.u32 %s174, 1
        %s788 = smul.addr %s787, 8
        %s789 = scalar_lea.vmem [#allocation5], %s788
        // Predicated region
        $region49: #{attention_forward.3} parent=39 // pred_check
          %p790 = pneg %p184
        $region50: #{attention_forward.3} parent=39 // pred_check_branch
          %792 = sbr.rel (%p790) target = $region52
        $region51: #{attention_forward.3} parent=39 // pred_region
          %794 = vsyncadd %s786, 0
          %s795 = sadd.s32 %s25, %s24
          %s796 = smul.addr %s795, 8
          %s797 = scalar_lea.hbm %s5, %s796
          %s799 = sshll.u32 %s789, 4
          %s800 = int_to_ptr.vmem [resolvable:$true] %s799
          %s801 = sshll.u32 %s797, 4
          %s802 = int_to_ptr.hbm [resolvable:$true] %s801
          %804 = dma.vmem_to_hbm [thread:$0]  %s800, 128, %s802, %s786
        $region52: #{attention_forward.3} parent=39 // pred_fallthru
          _
      $region40: #{attention_forward.3} parent=5 // pred_fallthru
        _
      %p805 = scmp.le.s32.totalorder 2, %s14
      // Predicated region
      $region53: #{attention_forward.3} parent=5 // pred_check
        %p806 = pneg %p805
      $region54: #{attention_forward.3} parent=5 // pred_check_branch
        %808 = sbr.rel (%p806) target = $region56
      $region55: #{attention_forward.3} parent=5 // pred_region
        %s809 = ssub.s32 %s14, 2
        // Predicated region
        $region57: #{attention_forward.3} parent=55 // pred_check
          %p810 = pneg %p190
        $region58: #{attention_forward.3} parent=55 // pred_check_branch
          %812 = sbr.rel (%p810) target = $region60
        $region59: #{attention_forward.3} parent=55 // pred_region
          %s813 = sand.u32 %s175, 1
          %s814 = scalar_lea.sflag [#allocation6], %s813
          %s815 = sand.u32 %s175, 1
          %s816 = smul.addr %s815, 8
          %s817 = scalar_lea.vmem [#allocation5], %s816
          %819 = dma.done %s814, 128
        $region60: #{attention_forward.3} parent=55 // pred_fallthru
          _
      $region56: #{attention_forward.3} parent=5 // pred_fallthru
        _
    $region6: #{attention_forward.3} parent=1 // loop_footer
      %s18 = sadd.s32 1, %s14
    $region7: #{attention_forward.3} parent=1 // loop_footer_branch
      %13 = sbr.rel target = $region3
    $region8: #{attention_forward.3} parent=1 // loop_exit
      _
    %820 = vsyncpa [#allocation6], 1
    %s821 = scalar_lea.sflag [#allocation6], 1
    %822 = vsyncpa %s821, 1

</llo_original>
